<compile_context>
chip_gen: v5e
topology: v5e:2x2
jax: 0.10.0
libtpu: 0.0.40
codegen_flags: <defaults>
</compile_context>

<pallas_src>
import functools

import jax
import jax.numpy as jnp
from jax import lax
from jax.experimental import pallas as pl
from jax.experimental.pallas import tpu as pltpu


# ---------------------------------------------------------------------------
# Fused kernel
# ---------------------------------------------------------------------------

def _bottleneck_kernel(x_ref, w1_ref, b1_ref, w2_ref, b2_ref, w3_ref, b3_ref,
                       o_ref, acc_ref, *, W, compute_dtype):
    # x_ref : (M, Cin)   flattened activations for one image (M = H*W)
    # w1    : (Cin, P)   w2: (3, 3P, P)   w3: (P, Cout)   (BN scale pre-folded)
    # b*    : (1, C)     folded BN bias (fp32)
    # o_ref : (M, Cout)  acc_ref: (M, P) fp32 scratch
    M = x_ref.shape[0]

    # ---- stage 1: 1x1 conv (+ folded bn1 scale) + bias + relu --------------
    x2d = x_ref[...]                                               # (M, Cin)
    y1 = jnp.dot(x2d, w1_ref[...], preferred_element_type=jnp.float32)
    y1 = jnp.maximum(y1 + b1_ref[...], 0.0)                       # (M, P) f32

    # ---- stage 2: 3x3 conv (pad=1, stride=1) + bias + relu ------------------
    # Column (dx) shifts are materialized once on y1 (roll + narrow (M,1)
    # masks) and concatenated along K -> (M, 3P).  Row (dy) shifts become
    # sublane-aligned slice-accumulates on acc_ref (1 store + 2 RMWs).
    w_col = lax.broadcasted_iota(jnp.int32, (M, 1), 0) % W
    mask_m1 = w_col >= 1          # dx = -1 valid where w-1 >= 0
    mask_p1 = w_col < (W - 1)     # dx = +1 valid where w+1 <  W

    y1_m1 = jnp.where(mask_m1, jnp.roll(y1, shift=1, axis=0), 0.0)   # y1[h,w-1]
    y1_p1 = jnp.where(mask_p1, jnp.roll(y1, shift=-1, axis=0), 0.0)  # y1[h,w+1]
    # kx order 0,1,2 <-> dx -1,0,+1 matches w2's (ky, kx*P+in, out) layout.
    y1cat = jnp.concatenate([y1_m1, y1, y1_p1], axis=1).astype(compute_dtype)

    # ky = 1 (dy = 0): plain store -> no explicit zero-init of the accumulator.
    acc_ref[...] = jnp.dot(y1cat, w2_ref[1], preferred_element_type=jnp.float32)
    # ky = 2 (dy = +1): out[h] += z[h+1]  -> rows [0, M-W)
    z2 = jnp.dot(y1cat, w2_ref[2], preferred_element_type=jnp.float32)
    acc_ref[pl.ds(0, M - W), :] += z2[W:, :]
    # ky = 0 (dy = -1): out[h] += z[h-1]  -> rows [W, M)
    z0 = jnp.dot(y1cat, w2_ref[0], preferred_element_type=jnp.float32)
    acc_ref[pl.ds(W, M - W), :] += z0[:M - W, :]

    y2 = jnp.maximum(acc_ref[...] + b2_ref[...], 0.0).astype(compute_dtype)

    # ---- stage 3: 1x1 conv + bias + residual add + relu ---------------------
    y3 = jnp.dot(y2, w3_ref[...], preferred_element_type=jnp.float32)
    y3 = y3 + b3_ref[...] + x2d.astype(jnp.float32)                # identity
    o_ref[...] = jnp.maximum(y3, 0.0).astype(o_ref.dtype)


# ---------------------------------------------------------------------------
# Wrappers
# ---------------------------------------------------------------------------

def _vmem_capacity_bytes():
    try:
        return int(pltpu.get_tpu_info().vmem_capacity_bytes)
    except Exception:
        return 64 * 2**20   # conservative (v7x per-TC)


def bottleneck_forward_nhwc(x_nhwc, params, *,
                            compute_dtype=jnp.bfloat16,
                            out_dtype=jnp.float32):
    """Fused Bottleneck forward, NHWC in / NHWC out (one image per grid step)."""
    N, H, W, Cin = x_nhwc.shape
    P = params["w1"].shape[1]
    Cout = params["w3"].shape[1]
    assert Cout == Cin, "identity shortcut requires inplanes == planes * expansion"
    M = H * W
    itemsize = jnp.dtype(compute_dtype).itemsize
    out_itemsize = jnp.dtype(out_dtype).itemsize

    # Flatten to lane-dense (N, M, C); fold BN scale into the weights (f32)
    # before the compute-dtype cast so the in-kernel epilogue is bias-only.
    x = x_nhwc.reshape(N, M, Cin).astype(compute_dtype)
    w1 = (params["w1"] * params["s1"]).astype(compute_dtype)                 # (Cin, P)
    w2 = (params["w2"] * params["s2"][0]).reshape(3, 3 * P, P).astype(compute_dtype)
    w3 = (params["w3"] * params["s3"]).astype(compute_dtype)                 # (P, Cout)
    b1, b2, b3 = params["b1"], params["b2"], params["b3"]                    # fp32 (1, C)

    kernel = functools.partial(_bottleneck_kernel, W=W, compute_dtype=compute_dtype)

    weight_bytes = (Cin * P + 9 * P * P + P * Cout) * itemsize
    bias_bytes = (2 * P + Cout) * 4
    flops = 2 * N * M * (Cin * P + 9 * P * P + P * Cout)
    bytes_accessed = (N * M * Cin * itemsize + N * M * Cout * out_itemsize
                      + weight_bytes + bias_bytes)
    cost = pl.CostEstimate(flops=flops, transcendentals=0,
                           bytes_accessed=bytes_accessed)

    # VMEM budget: double-buffered x/out blocks + (possibly double-buffered)
    # resident weights + f32 accumulator scratch + in-kernel temporaries,
    # clamped by the actual generation's VMEM capacity (v5e/v6e 128 MiB,
    # v7x 64 MiB per TensorCore).
    block_bytes = (2 * M * Cin * itemsize + 2 * M * Cout * out_itemsize
                   + 2 * weight_bytes + bias_bytes
                   + M * P * 4
                   + 8 * M * max(P, Cout) * 4 + 3 * M * P * itemsize)
    capacity = _vmem_capacity_bytes()
    vmem_limit = int(min(capacity - 4 * 2**20,
                         max(32 * 2**20, 2 * block_bytes)))

    out = pl.pallas_call(
        kernel,
        out_shape=jax.ShapeDtypeStruct((N, M, Cout), out_dtype),
        grid=(N,),
        in_specs=[
            pl.BlockSpec((None, M, Cin), lambda n: (n, 0, 0)),   # x (per image)
            pl.BlockSpec((Cin, P), lambda n: (0, 0)),            # w1 (resident)
            pl.BlockSpec((1, P), lambda n: (0, 0)),              # b1
            pl.BlockSpec((3, 3 * P, P), lambda n: (0, 0, 0)),    # w2 (resident)
            pl.BlockSpec((1, P), lambda n: (0, 0)),              # b2
            pl.BlockSpec((P, Cout), lambda n: (0, 0)),           # w3 (resident)
            pl.BlockSpec((1, Cout), lambda n: (0, 0)),           # b3
        ],
        out_specs=pl.BlockSpec((None, M, Cout), lambda n: (n, 0, 0)),
        scratch_shapes=[pltpu.VMEM((M, P), jnp.float32)],
        compiler_params=pltpu.CompilerParams(
            dimension_semantics=("parallel",),
            vmem_limit_bytes=vmem_limit),
        cost_estimate=cost,
    )(x, w1, b1, w2, b2, w3, b3)
    return out.reshape(N, H, W, Cout)


def bottleneck_forward(x_nchw, params, *,
                       compute_dtype=jnp.bfloat16,
                       out_dtype=jnp.float32):
    """PyTorch-convention (NCHW) wrapper around the fused NHWC kernel."""
    x = jnp.transpose(x_nchw, (0, 2, 3, 1))
    out = bottleneck_forward_nhwc(x, params, compute_dtype=compute_dtype,
                                  out_dtype=out_dtype)
    return jnp.transpose(out, (0, 3, 1, 2))


# ---------------------------------------------------------------------------
# Parameter construction (deterministic, synthetic)
# ---------------------------------------------------------------------------

def make_params(key, inplanes, planes, eps=1e-5):
    exp = 4
    keys = jax.random.split(key, 6)

    def bn(k, c):
        kg, kb, km, kv = jax.random.split(k, 4)
        gamma = 1.0 + 0.1 * jax.random.normal(kg, (c,), jnp.float32)
        beta = 0.1 * jax.random.normal(kb, (c,), jnp.float32)
        mean = 0.1 * jax.random.normal(km, (c,), jnp.float32)
        var = jax.random.uniform(kv, (c,), jnp.float32, 0.5, 1.5)
        scale = gamma / jnp.sqrt(var + eps)
        bias = beta - mean * scale
        return scale.reshape(1, c), bias.reshape(1, c)

    w1 = 0.1 * jax.random.normal(keys[0], (inplanes, planes), jnp.float32)
    w2 = 0.1 * jax.random.normal(keys[1], (3, 3, planes, planes), jnp.float32)
    w3 = 0.1 * jax.random.normal(keys[2], (planes, planes * exp), jnp.float32)
    s1, b1 = bn(keys[3], planes)
    s2, b2 = bn(keys[4], planes)
    s3, b3 = bn(keys[5], planes * exp)
    return dict(w1=w1, s1=s1, b1=b1, w2=w2, s2=s2, b2=b2, w3=w3, s3=s3, b3=b3)


# ---------------------------------------------------------------------------
# Pure-JAX reference (for correctness check)
# ---------------------------------------------------------------------------

def ref_bottleneck(x_nchw, p):
    x = jnp.transpose(x_nchw, (0, 2, 3, 1))
    y = jnp.einsum("nhwc,cd->nhwd", x, p["w1"])
    y = jnp.maximum(y * p["s1"][0] + p["b1"][0], 0.0)
    y = lax.conv_general_dilated(
        y, p["w2"], window_strides=(1, 1), padding=((1, 1), (1, 1)),
        dimension_numbers=("NHWC", "HWIO", "NHWC"))
    y = jnp.maximum(y * p["s2"][0] + p["b2"][0], 0.0)
    y = jnp.einsum("nhwc,cd->nhwd", y, p["w3"])
    y = y * p["s3"][0] + p["b3"][0]
    y = jnp.maximum(y + x, 0.0)
    return jnp.transpose(y, (0, 3, 1, 2))


if __name__ == "__main__":
    key = jax.random.PRNGKey(0)
    kx, kp = jax.random.split(key)

    N, INPLANES, PLANES, H, W = 2, 16, 4, 16, 16   # planes * 4 == inplanes
    x = jax.random.normal(kx, (N, INPLANES, H, W), jnp.float32)
    params = make_params(kp, INPLANES, PLANES)

    ref = ref_bottleneck(x, params)

    # f32 compute path (bit-exactness/testing mode) — tight tolerance.
    fwd_f32 = jax.jit(functools.partial(bottleneck_forward,
                                        compute_dtype=jnp.float32))
    out = jax.block_until_ready(fwd_f32(x, params))
    assert out.shape == (N, INPLANES, H, W)
    assert jnp.allclose(out, ref, atol=2e-3, rtol=2e-3), "f32 mismatch vs reference"

    # Default (perf) path: bf16 MXU operands + bf16 output; loose sanity check.
    # NOTE: the residual identity uses the bf16-quantized input in this path.
    fwd_bf16 = jax.jit(functools.partial(bottleneck_forward,
                                         out_dtype=jnp.bfloat16))
    out_bf16 = jax.block_until_ready(fwd_bf16(x, params))
    assert out_bf16.shape == (N, INPLANES, H, W)
    assert jnp.allclose(out_bf16.astype(jnp.float32), ref,
                        atol=1e-1, rtol=1e-1), "bf16 mismatch vs reference"

    print("KERNEL_OK")
</pallas_src>

<mosaic_0001>
module attributes {stable_mosaic.version = 11 : i64} {
  func.func @_bottleneck_kernel(%arg0: i32, %arg1: memref<1x256x16xf32, #tpu.memory_space<vmem>>, %arg2: memref<16x4xf32, #tpu.memory_space<vmem>>, %arg3: memref<1x4xf32, #tpu.memory_space<vmem>>, %arg4: memref<3x12x4xf32, #tpu.memory_space<vmem>>, %arg5: memref<1x4xf32, #tpu.memory_space<vmem>>, %arg6: memref<4x16xf32, #tpu.memory_space<vmem>>, %arg7: memref<1x16xf32, #tpu.memory_space<vmem>>, %arg8: memref<1x256x16xf32, #tpu.memory_space<vmem>>, %arg9: memref<256x4xf32, #tpu.memory_space<vmem>>) attributes {dimension_semantics = [#tpu.dimension_semantics<parallel>], iteration_bounds = array<i64: 2>, scalar_prefetch = 0 : i64, scratch_operands = 1 : i64, tpu.core_type = #tpu.core_type<tc>, window_params = [{transform_indices = @transform_0, window_bounds = array<i64: 1, 256, 16>}, {pipeline_mode = #tpu.pipeline_mode<synchronous>, transform_indices = @transform_1, window_bounds = array<i64: 16, 4>}, {pipeline_mode = #tpu.pipeline_mode<synchronous>, transform_indices = @transform_2, window_bounds = array<i64: 1, 4>}, {pipeline_mode = #tpu.pipeline_mode<synchronous>, transform_indices = @transform_3, window_bounds = array<i64: 3, 12, 4>}, {pipeline_mode = #tpu.pipeline_mode<synchronous>, transform_indices = @transform_4, window_bounds = array<i64: 1, 4>}, {pipeline_mode = #tpu.pipeline_mode<synchronous>, transform_indices = @transform_5, window_bounds = array<i64: 4, 16>}, {pipeline_mode = #tpu.pipeline_mode<synchronous>, transform_indices = @transform_6, window_bounds = array<i64: 1, 16>}, {transform_indices = @transform_7, window_bounds = array<i64: 1, 256, 16>}]} {
    %c0 = arith.constant 0 : index
    %c0_0 = arith.constant 0 : index
    %c0_1 = arith.constant 0 : index
    %0 = vector.load %arg1[%c0, %c0_0, %c0_1] : memref<1x256x16xf32, #tpu.memory_space<vmem>>, vector<1x256x16xf32>
    %1 = vector.shape_cast %0 : vector<1x256x16xf32> to vector<256x16xf32>
    %c0_2 = arith.constant 0 : index
    %c0_3 = arith.constant 0 : index
    %2 = vector.load %arg2[%c0_2, %c0_3] : memref<16x4xf32, #tpu.memory_space<vmem>>, vector<16x4xf32>
    %cst = arith.constant dense<0.000000e+00> : vector<256x4xf32>
    %3 = tpu.matmul %1, %2, %cst {dimension_numbers = #tpu.dot_dimension_numbers<[1], [0], [0], [1], [0, 0, 1, 1], [], []>} : vector<256x16xf32>, vector<16x4xf32>, vector<256x4xf32> -> vector<256x4xf32>
    %c0_4 = arith.constant 0 : index
    %c0_5 = arith.constant 0 : index
    %4 = vector.load %arg3[%c0_4, %c0_5] : memref<1x4xf32, #tpu.memory_space<vmem>>, vector<1x4xf32>
    %5 = vector.broadcast %4 : vector<1x4xf32> to vector<256x4xf32>
    %6 = arith.addf %3, %5 : vector<256x4xf32>
    %cst_6 = arith.constant 0.000000e+00 : f32
    %7 = vector.broadcast %cst_6 : f32 to vector<256x4xf32>
    %8 = arith.maximumf %6, %7 : vector<256x4xf32>
    %9 = tpu.iota {dimensions = array<i32: 0>} : vector<256x1xi32>
    %c16_i32 = arith.constant 16 : i32
    %c0_i32 = arith.constant 0 : i32
    %10 = arith.cmpi eq, %c16_i32, %c0_i32 : i32
    %c1_i32 = arith.constant 1 : i32
    %11 = arith.select %10, %c1_i32, %c16_i32 : i32
    %12 = vector.broadcast %11 : i32 to vector<256x1xi32>
    %13 = arith.remsi %9, %12 : vector<256x1xi32>
    %c0_i32_7 = arith.constant 0 : i32
    %14 = vector.broadcast %c0_i32_7 : i32 to vector<256x1xi32>
    %15 = arith.cmpi ne, %13, %14 : vector<256x1xi32>
    %c0_i32_8 = arith.constant 0 : i32
    %16 = vector.broadcast %c0_i32_8 : i32 to vector<256x1xi32>
    %17 = arith.cmpi slt, %13, %16 : vector<256x1xi32>
    %c0_i32_9 = arith.constant 0 : i32
    %18 = arith.cmpi slt, %11, %c0_i32_9 : i32
    %19 = vector.broadcast %18 : i1 to vector<256x1xi1>
    %20 = vector.broadcast %19 : vector<256x1xi1> to vector<256x1xi1>
    %21 = arith.xori %17, %20 : vector<256x1xi1>
    %22 = arith.andi %21, %15 : vector<256x1xi1>
    %23 = vector.broadcast %11 : i32 to vector<256x1xi32>
    %24 = arith.addi %13, %23 : vector<256x1xi32>
    %25 = arith.select %22, %24, %13 : vector<256x1xi1>, vector<256x1xi32>
    %c1_i32_10 = arith.constant 1 : i32
    %26 = vector.broadcast %c1_i32_10 : i32 to vector<256x1xi32>
    %27 = arith.cmpi sge, %25, %26 : vector<256x1xi32>
    %c15_i32 = arith.constant 15 : i32
    %28 = vector.broadcast %c15_i32 : i32 to vector<256x1xi32>
    %29 = arith.cmpi slt, %25, %28 : vector<256x1xi32>
    %30 = vector.extract_strided_slice %8 {offsets = [255, 0], sizes = [1, 4], strides = [1, 1]} : vector<256x4xf32> to vector<1x4xf32>
    %31 = vector.extract_strided_slice %8 {offsets = [0, 0], sizes = [255, 4], strides = [1, 1]} : vector<256x4xf32> to vector<255x4xf32>
    %32 = tpu.concatenate %30, %31 in 0 : vector<1x4xf32>, vector<255x4xf32> -> vector<256x4xf32>
    %cst_11 = arith.constant 0.000000e+00 : f32
    %33 = vector.shape_cast %27 : vector<256x1xi1> to vector<256x1xi1>
    %34 = vector.broadcast %33 : vector<256x1xi1> to vector<256x4xi1>
    %35 = vector.broadcast %cst_11 : f32 to vector<256x4xf32>
    %36 = arith.select %34, %32, %35 : vector<256x4xi1>, vector<256x4xf32>
    %37 = vector.extract_strided_slice %8 {offsets = [1, 0], sizes = [255, 4], strides = [1, 1]} : vector<256x4xf32> to vector<255x4xf32>
    %38 = vector.extract_strided_slice %8 {offsets = [0, 0], sizes = [1, 4], strides = [1, 1]} : vector<256x4xf32> to vector<1x4xf32>
    %39 = tpu.concatenate %37, %38 in 0 : vector<255x4xf32>, vector<1x4xf32> -> vector<256x4xf32>
    %cst_12 = arith.constant 0.000000e+00 : f32
    %40 = vector.shape_cast %29 : vector<256x1xi1> to vector<256x1xi1>
    %41 = vector.broadcast %40 : vector<256x1xi1> to vector<256x4xi1>
    %42 = vector.broadcast %cst_12 : f32 to vector<256x4xf32>
    %43 = arith.select %41, %39, %42 : vector<256x4xi1>, vector<256x4xf32>
    %44 = tpu.concatenate %36, %8, %43 in 1 : vector<256x4xf32>, vector<256x4xf32>, vector<256x4xf32> -> vector<256x12xf32>
    %c1 = arith.constant 1 : index
    %c0_13 = arith.constant 0 : index
    %c0_14 = arith.constant 0 : index
    %45 = vector.load %arg4[%c1, %c0_13, %c0_14] : memref<3x12x4xf32, #tpu.memory_space<vmem>>, vector<1x12x4xf32>
    %46 = vector.shape_cast %45 : vector<1x12x4xf32> to vector<12x4xf32>
    %cst_15 = arith.constant dense<0.000000e+00> : vector<256x4xf32>
    %47 = tpu.matmul %44, %46, %cst_15 {dimension_numbers = #tpu.dot_dimension_numbers<[1], [0], [0], [1], [0, 0, 1, 1], [], []>} : vector<256x12xf32>, vector<12x4xf32>, vector<256x4xf32> -> vector<256x4xf32>
    %c0_16 = arith.constant 0 : index
    %c0_17 = arith.constant 0 : index
    %48 = vector.load %arg9[%c0_16, %c0_17] : memref<256x4xf32, #tpu.memory_space<vmem>>, vector<256x4xf32>
    tpu.vector_store %arg9[%c0_16, %c0_17], %47 {strides = array<i32>} : memref<256x4xf32, #tpu.memory_space<vmem>>, vector<256x4xf32>,
    %c2 = arith.constant 2 : index
    %c0_18 = arith.constant 0 : index
    %c0_19 = arith.constant 0 : index
    %49 = vector.load %arg4[%c2, %c0_18, %c0_19] : memref<3x12x4xf32, #tpu.memory_space<vmem>>, vector<1x12x4xf32>
    %50 = vector.shape_cast %49 : vector<1x12x4xf32> to vector<12x4xf32>
    %cst_20 = arith.constant dense<0.000000e+00> : vector<256x4xf32>
    %51 = tpu.matmul %44, %50, %cst_20 {dimension_numbers = #tpu.dot_dimension_numbers<[1], [0], [0], [1], [0, 0, 1, 1], [], []>} : vector<256x12xf32>, vector<12x4xf32>, vector<256x4xf32> -> vector<256x4xf32>
    %c0_21 = arith.constant 0 : index
    %c0_22 = arith.constant 0 : index
    %52 = vector.load %arg9[%c0_21, %c0_22] : memref<256x4xf32, #tpu.memory_space<vmem>>, vector<240x4xf32>
    %53 = vector.extract_strided_slice %51 {offsets = [16, 0], sizes = [240, 4], strides = [1, 1]} : vector<256x4xf32> to vector<240x4xf32>
    %54 = arith.addf %52, %53 : vector<240x4xf32>
    %c0_23 = arith.constant 0 : index
    %c0_24 = arith.constant 0 : index
    %55 = vector.load %arg9[%c0_23, %c0_24] : memref<256x4xf32, #tpu.memory_space<vmem>>, vector<240x4xf32>
    tpu.vector_store %arg9[%c0_23, %c0_24], %54 {strides = array<i32>} : memref<256x4xf32, #tpu.memory_space<vmem>>, vector<240x4xf32>,
    %c0_25 = arith.constant 0 : index
    %c0_26 = arith.constant 0 : index
    %c0_27 = arith.constant 0 : index
    %56 = vector.load %arg4[%c0_25, %c0_26, %c0_27] : memref<3x12x4xf32, #tpu.memory_space<vmem>>, vector<1x12x4xf32>
    %57 = vector.shape_cast %56 : vector<1x12x4xf32> to vector<12x4xf32>
    %cst_28 = arith.constant dense<0.000000e+00> : vector<256x4xf32>
    %58 = tpu.matmul %44, %57, %cst_28 {dimension_numbers = #tpu.dot_dimension_numbers<[1], [0], [0], [1], [0, 0, 1, 1], [], []>} : vector<256x12xf32>, vector<12x4xf32>, vector<256x4xf32> -> vector<256x4xf32>
    %c16 = arith.constant 16 : index
    %c0_29 = arith.constant 0 : index
    %59 = vector.load %arg9[%c16, %c0_29] : memref<256x4xf32, #tpu.memory_space<vmem>>, vector<240x4xf32>
    %60 = vector.extract_strided_slice %58 {offsets = [0, 0], sizes = [240, 4], strides = [1, 1]} : vector<256x4xf32> to vector<240x4xf32>
    %61 = arith.addf %59, %60 : vector<240x4xf32>
    %c16_30 = arith.constant 16 : index
    %c0_31 = arith.constant 0 : index
    %62 = vector.load %arg9[%c16_30, %c0_31] : memref<256x4xf32, #tpu.memory_space<vmem>>, vector<240x4xf32>
    tpu.vector_store %arg9[%c16_30, %c0_31], %61 {strides = array<i32>} : memref<256x4xf32, #tpu.memory_space<vmem>>, vector<240x4xf32>,
    %c0_32 = arith.constant 0 : index
    %c0_33 = arith.constant 0 : index
    %63 = vector.load %arg9[%c0_32, %c0_33] : memref<256x4xf32, #tpu.memory_space<vmem>>, vector<256x4xf32>
    %c0_34 = arith.constant 0 : index
    %c0_35 = arith.constant 0 : index
    %64 = vector.load %arg5[%c0_34, %c0_35] : memref<1x4xf32, #tpu.memory_space<vmem>>, vector<1x4xf32>
    %65 = vector.broadcast %64 : vector<1x4xf32> to vector<256x4xf32>
    %66 = arith.addf %63, %65 : vector<256x4xf32>
    %cst_36 = arith.constant 0.000000e+00 : f32
    %67 = vector.broadcast %cst_36 : f32 to vector<256x4xf32>
    %68 = arith.maximumf %66, %67 : vector<256x4xf32>
    %c0_37 = arith.constant 0 : index
    %c0_38 = arith.constant 0 : index
    %69 = vector.load %arg6[%c0_37, %c0_38] : memref<4x16xf32, #tpu.memory_space<vmem>>, vector<4x16xf32>
    %cst_39 = arith.constant dense<0.000000e+00> : vector<256x16xf32>
    %70 = tpu.matmul %68, %69, %cst_39 {dimension_numbers = #tpu.dot_dimension_numbers<[1], [0], [0], [1], [0, 0, 1, 1], [], []>} : vector<256x4xf32>, vector<4x16xf32>, vector<256x16xf32> -> vector<256x16xf32>
    %c0_40 = arith.constant 0 : index
    %c0_41 = arith.constant 0 : index
    %71 = vector.load %arg7[%c0_40, %c0_41] : memref<1x16xf32, #tpu.memory_space<vmem>>, vector<1x16xf32>
    %72 = vector.broadcast %71 : vector<1x16xf32> to vector<256x16xf32>
    %73 = arith.addf %70, %72 : vector<256x16xf32>
    %74 = arith.addf %73, %1 : vector<256x16xf32>
    %cst_42 = arith.constant 0.000000e+00 : f32
    %75 = vector.broadcast %cst_42 : f32 to vector<256x16xf32>
    %76 = arith.maximumf %74, %75 : vector<256x16xf32>
    %c0_43 = arith.constant 0 : index
    %c0_44 = arith.constant 0 : index
    %c0_45 = arith.constant 0 : index
    %77 = vector.load %arg8[%c0_43, %c0_44, %c0_45] : memref<1x256x16xf32, #tpu.memory_space<vmem>>, vector<1x256x16xf32>
    %78 = vector.shape_cast %77 : vector<1x256x16xf32> to vector<256x16xf32>
    %79 = vector.shape_cast %76 : vector<256x16xf32> to vector<1x256x16xf32>
    tpu.vector_store %arg8[%c0_43, %c0_44, %c0_45], %79 {strides = array<i32>} : memref<1x256x16xf32, #tpu.memory_space<vmem>>, vector<1x256x16xf32>,
    return
  }
  func.func @transform_0(%arg0: i32) -> (i32, i32, i32) {
    %c0_i32 = arith.constant 0 : i32
    %c0_i32_0 = arith.constant 0 : i32
    %c0_i32_1 = arith.constant 0 : i32
    return %arg0, %c0_i32, %c0_i32_0 : i32, i32, i32
  }
  func.func @transform_1(%arg0: i32) -> (i32, i32) {
    %c0_i32 = arith.constant 0 : i32
    %c0_i32_0 = arith.constant 0 : i32
    %c0_i32_1 = arith.constant 0 : i32
    return %c0_i32, %c0_i32_0 : i32, i32
  }
  func.func @transform_2(%arg0: i32) -> (i32, i32) {
    %c0_i32 = arith.constant 0 : i32
    %c0_i32_0 = arith.constant 0 : i32
    %c0_i32_1 = arith.constant 0 : i32
    return %c0_i32, %c0_i32_0 : i32, i32
  }
  func.func @transform_3(%arg0: i32) -> (i32, i32, i32) {
    %c0_i32 = arith.constant 0 : i32
    %c0_i32_0 = arith.constant 0 : i32
    %c0_i32_1 = arith.constant 0 : i32
    %c0_i32_2 = arith.constant 0 : i32
    return %c0_i32, %c0_i32_0, %c0_i32_1 : i32, i32, i32
  }
  func.func @transform_4(%arg0: i32) -> (i32, i32) {
    %c0_i32 = arith.constant 0 : i32
    %c0_i32_0 = arith.constant 0 : i32
    %c0_i32_1 = arith.constant 0 : i32
    return %c0_i32, %c0_i32_0 : i32, i32
  }
  func.func @transform_5(%arg0: i32) -> (i32, i32) {
    %c0_i32 = arith.constant 0 : i32
    %c0_i32_0 = arith.constant 0 : i32
    %c0_i32_1 = arith.constant 0 : i32
    return %c0_i32, %c0_i32_0 : i32, i32
  }
  func.func @transform_6(%arg0: i32) -> (i32, i32) {
    %c0_i32 = arith.constant 0 : i32
    %c0_i32_0 = arith.constant 0 : i32
    %c0_i32_1 = arith.constant 0 : i32
    return %c0_i32, %c0_i32_0 : i32, i32
  }
  func.func @transform_7(%arg0: i32) -> (i32, i32, i32) {
    %c0_i32 = arith.constant 0 : i32
    %c0_i32_0 = arith.constant 0 : i32
    %c0_i32_1 = arith.constant 0 : i32
    return %arg0, %c0_i32, %c0_i32_0 : i32, i32, i32
  }
}

</mosaic_0001>

<llo_original>
// kernel: bottleneck_forward.1
$region0: #{bottleneck_forward.1}
  #allocation0 [shape = 'u32[]', space=smem, size = 0x4, offset = 0x4, fixed_abs, tag = 'smem constant byte address 0x4 - core index']
  #allocation1 [shape = 'u32[72,128]{1,0:T(1,128)}', space=vmem, size = 0x9000, scoped, tag = 'internal scratch']
  #allocation2 [shape = 'f32[256,4]{1,0:T(8,128)}', space=vmem, size = 0x20000, scoped, tag = 'scratch operand']
  %s0 = inlined_call_operand.vmem [shape: f32[2,256,16], index: 0, kind: input, shape index: {}]
  %s1 = inlined_call_operand.vmem [shape: f32[16,4], index: 1, kind: input, shape index: {}]
  %s2 = inlined_call_operand.vmem [shape: f32[1,4], index: 2, kind: input, shape index: {}]
  %s3 = inlined_call_operand.vmem [shape: f32[3,12,4], index: 3, kind: input, shape index: {}]
  %s4 = inlined_call_operand.vmem [shape: f32[1,4], index: 4, kind: input, shape index: {}]
  %s5 = inlined_call_operand.vmem [shape: f32[4,16], index: 5, kind: input, shape index: {}]
  %s6 = inlined_call_operand.vmem [shape: f32[1,16], index: 6, kind: input, shape index: {}]
  %s7 = inlined_call_operand.vmem [shape: f32[2,256,16], index: 7, kind: output, shape index: {}]
  %s8 = sld [smem:[#allocation0]]
  $region61: #{bottleneck_forward.1} parent=0
    _
  %s10 = ssub.s32 1, %s8
  %s11 = scalar_select 0, %s10, %s8
  loop: start=0, step=1, limit=4
  $region2: #{bottleneck_forward.1} parent=0 // loop_pre_header
    _
  $region3: #{bottleneck_forward.1} parent=0 // loop_header
    %s13 = sphi 0, %s17
    %p14 = scmp.ge.s32.totalorder %s13, 4
    %s23 = sphi 0, %s25
    %s26 = sphi 0, %s23
    %s27 = sphi 0, %s26
    %s43 = sphi 0, %s27
    %s47 = sphi 0, %s47
    %s49 = sphi 0, %s47
    %s50 = sphi 0, %s49
    %s64 = sphi 0, %s50
    %s68 = sphi 0, %s68
    %s70 = sphi 0, %s68
    %s71 = sphi 0, %s70
    %s85 = sphi 0, %s71
    %s89 = sphi 0, %s89
    %s91 = sphi 0, %s89
    %s92 = sphi 0, %s91
    %s106 = sphi 0, %s92
    %s110 = sphi 0, %s110
    %s112 = sphi 0, %s110
    %s113 = sphi 0, %s112
    %s127 = sphi 0, %s113
    %s131 = sphi 0, %s131
    %s133 = sphi 0, %s131
    %s134 = sphi 0, %s133
    %s148 = sphi 0, %s134
    %s152 = sphi 0, %s152
    %s154 = sphi 0, %s152
    %s155 = sphi 0, %s154
    %s169 = sphi 0, %s155
    %s175 = sphi 0, %s177
    %s178 = sphi 0, %s175
    %s179 = sphi 0, %s178
    %s195 = sphi 0, %s179
  $region4: #{bottleneck_forward.1} parent=0 // loop_header_branch
    %16 = sbr.rel (%p14) target = $region8
  $region5: #{bottleneck_forward.1} parent=0 // loop_body
    %s18 = ssub.s32 %s13, 1
    %s19 = ssub.s32 %s13, 2
    %s20 = sadd.s32 %s13, 1
    %s21 = ssub.s32 %s13, %s20
    %p22 = scmp.eq.s32.totalorder %s21, 0
    %s24 = sadd.s32 %s23, 1
    %s25 = scalar_select %p22, %s23, %s24
    %p28 = pneg %p22
    %p29 = scmp.eq.s32.totalorder %s13, 1
    %p30 = por %p28, %p29
    %p31 = scmp.ne.s32.totalorder %s23, %s26
    %p32 = scmp.eq.s32.totalorder %s13, 0
    %p33 = por %p31, %p32
    %p34 = scmp.ne.s32.totalorder %s23, %s26
    %p35 = scmp.eq.s32.totalorder %s18, 1
    %p36 = por %p34, %p35
    %p37 = scmp.ne.s32.totalorder %s26, %s27
    %p38 = scmp.eq.s32.totalorder %s18, 0
    %p39 = por %p37, %p38
    %p40 = scmp.ne.s32.totalorder %s26, %s27
    %p41 = scmp.eq.s32.totalorder %s19, 1
    %p42 = por %p40, %p41
    %p44 = scmp.ne.s32.totalorder %s27, %s43
    %p45 = scmp.eq.s32.totalorder %s19, 0
    %p46 = por %p44, %p45
    %s48 = sadd.s32 %s47, 1
    %p51 = scmp.eq.s32.totalorder %s13, 1
    %p52 = scmp.ne.s32.totalorder %s47, %s49
    %p53 = scmp.eq.s32.totalorder %s13, 0
    %p54 = por %p52, %p53
    %p55 = scmp.ne.s32.totalorder %s47, %s49
    %p56 = scmp.eq.s32.totalorder %s18, 1
    %p57 = por %p55, %p56
    %p58 = scmp.ne.s32.totalorder %s49, %s50
    %p59 = scmp.eq.s32.totalorder %s18, 0
    %p60 = por %p58, %p59
    %p61 = scmp.ne.s32.totalorder %s49, %s50
    %p62 = scmp.eq.s32.totalorder %s19, 1
    %p63 = por %p61, %p62
    %p65 = scmp.ne.s32.totalorder %s50, %s64
    %p66 = scmp.eq.s32.totalorder %s19, 0
    %p67 = por %p65, %p66
    %s69 = sadd.s32 %s68, 1
    %p72 = scmp.eq.s32.totalorder %s13, 1
    %p73 = scmp.ne.s32.totalorder %s68, %s70
    %p74 = scmp.eq.s32.totalorder %s13, 0
    %p75 = por %p73, %p74
    %p76 = scmp.ne.s32.totalorder %s68, %s70
    %p77 = scmp.eq.s32.totalorder %s18, 1
    %p78 = por %p76, %p77
    %p79 = scmp.ne.s32.totalorder %s70, %s71
    %p80 = scmp.eq.s32.totalorder %s18, 0
    %p81 = por %p79, %p80
    %p82 = scmp.ne.s32.totalorder %s70, %s71
    %p83 = scmp.eq.s32.totalorder %s19, 1
    %p84 = por %p82, %p83
    %p86 = scmp.ne.s32.totalorder %s71, %s85
    %p87 = scmp.eq.s32.totalorder %s19, 0
    %p88 = por %p86, %p87
    %s90 = sadd.s32 %s89, 1
    %p93 = scmp.eq.s32.totalorder %s13, 1
    %p94 = scmp.ne.s32.totalorder %s89, %s91
    %p95 = scmp.eq.s32.totalorder %s13, 0
    %p96 = por %p94, %p95
    %p97 = scmp.ne.s32.totalorder %s89, %s91
    %p98 = scmp.eq.s32.totalorder %s18, 1
    %p99 = por %p97, %p98
    %p100 = scmp.ne.s32.totalorder %s91, %s92
    %p101 = scmp.eq.s32.totalorder %s18, 0
    %p102 = por %p100, %p101
    %p103 = scmp.ne.s32.totalorder %s91, %s92
    %p104 = scmp.eq.s32.totalorder %s19, 1
    %p105 = por %p103, %p104
    %p107 = scmp.ne.s32.totalorder %s92, %s106
    %p108 = scmp.eq.s32.totalorder %s19, 0
    %p109 = por %p107, %p108
    %s111 = sadd.s32 %s110, 1
    %p114 = scmp.eq.s32.totalorder %s13, 1
    %p115 = scmp.ne.s32.totalorder %s110, %s112
    %p116 = scmp.eq.s32.totalorder %s13, 0
    %p117 = por %p115, %p116
    %p118 = scmp.ne.s32.totalorder %s110, %s112
    %p119 = scmp.eq.s32.totalorder %s18, 1
    %p120 = por %p118, %p119
    %p121 = scmp.ne.s32.totalorder %s112, %s113
    %p122 = scmp.eq.s32.totalorder %s18, 0
    %p123 = por %p121, %p122
    %p124 = scmp.ne.s32.totalorder %s112, %s113
    %p125 = scmp.eq.s32.totalorder %s19, 1
    %p126 = por %p124, %p125
    %p128 = scmp.ne.s32.totalorder %s113, %s127
    %p129 = scmp.eq.s32.totalorder %s19, 0
    %p130 = por %p128, %p129
    %s132 = sadd.s32 %s131, 1
    %p135 = scmp.eq.s32.totalorder %s13, 1
    %p136 = scmp.ne.s32.totalorder %s131, %s133
    %p137 = scmp.eq.s32.totalorder %s13, 0
    %p138 = por %p136, %p137
    %p139 = scmp.ne.s32.totalorder %s131, %s133
    %p140 = scmp.eq.s32.totalorder %s18, 1
    %p141 = por %p139, %p140
    %p142 = scmp.ne.s32.totalorder %s133, %s134
    %p143 = scmp.eq.s32.totalorder %s18, 0
    %p144 = por %p142, %p143
    %p145 = scmp.ne.s32.totalorder %s133, %s134
    %p146 = scmp.eq.s32.totalorder %s19, 1
    %p147 = por %p145, %p146
    %p149 = scmp.ne.s32.totalorder %s134, %s148
    %p150 = scmp.eq.s32.totalorder %s19, 0
    %p151 = por %p149, %p150
    %s153 = sadd.s32 %s152, 1
    %p156 = scmp.eq.s32.totalorder %s13, 1
    %p157 = scmp.ne.s32.totalorder %s152, %s154
    %p158 = scmp.eq.s32.totalorder %s13, 0
    %p159 = por %p157, %p158
    %p160 = scmp.ne.s32.totalorder %s152, %s154
    %p161 = scmp.eq.s32.totalorder %s18, 1
    %p162 = por %p160, %p161
    %p163 = scmp.ne.s32.totalorder %s154, %s155
    %p164 = scmp.eq.s32.totalorder %s18, 0
    %p165 = por %p163, %p164
    %p166 = scmp.ne.s32.totalorder %s154, %s155
    %p167 = scmp.eq.s32.totalorder %s19, 1
    %p168 = por %p166, %p167
    %p170 = scmp.ne.s32.totalorder %s155, %s169
    %p171 = scmp.eq.s32.totalorder %s19, 0
    %p172 = por %p170, %p171
    %s173 = ssub.s32 %s13, %s20
    %p174 = scmp.eq.s32.totalorder %s173, 0
    %s176 = sadd.s32 %s175, 1
    %s177 = scalar_select %p174, %s175, %s176
    %p180 = pneg %p174
    %p181 = scmp.eq.s32.totalorder %s13, 1
    %p182 = por %p180, %p181
    %p183 = scmp.ne.s32.totalorder %s175, %s178
    %p184 = scmp.eq.s32.totalorder %s13, 0
    %p185 = por %p183, %p184
    %p186 = scmp.ne.s32.totalorder %s175, %s178
    %p187 = scmp.eq.s32.totalorder %s18, 1
    %p188 = por %p186, %p187
    %p189 = scmp.ne.s32.totalorder %s178, %s179
    %p190 = scmp.eq.s32.totalorder %s18, 0
    %p191 = por %p189, %p190
    %p192 = scmp.ne.s32.totalorder %s178, %s179
    %p193 = scmp.eq.s32.totalorder %s19, 1
    %p194 = por %p192, %p193
    %p196 = scmp.ne.s32.totalorder %s179, %s195
    %p197 = scmp.eq.s32.totalorder %s19, 0
    %p198 = por %p196, %p197
    %p199 = scmp.le.s32.totalorder 1, %s13
    %p200 = scmp.lt.s32.totalorder %s13, 3
    %p201 = pnand %p199, %p200
    %p202 = pneg %p201
    // Predicated region
    $region9: #{bottleneck_forward.1} parent=5 // pred_check
      _
    $region10: #{bottleneck_forward.1} parent=5 // pred_check_branch
      %204 = sbr.rel (%p201) target = $region12
    $region11: #{bottleneck_forward.1} parent=5 // pred_region
      %s205 = ssub.s32 %s13, 1
      // Predicated region
      $region13: #{bottleneck_forward.1} parent=11 // pred_check
        %p206 = pneg %p60
      $region14: #{bottleneck_forward.1} parent=11 // pred_check_branch
        %208 = sbr.rel (%p206) target = $region16
      $region15: #{bottleneck_forward.1} parent=11 // pred_region
        _
      $region16: #{bottleneck_forward.1} parent=11 // pred_fallthru
        _
      // Predicated region
      $region17: #{bottleneck_forward.1} parent=11 // pred_check
        %p209 = pneg %p81
      $region18: #{bottleneck_forward.1} parent=11 // pred_check_branch
        %211 = sbr.rel (%p209) target = $region20
      $region19: #{bottleneck_forward.1} parent=11 // pred_region
        _
      $region20: #{bottleneck_forward.1} parent=11 // pred_fallthru
        _
      // Predicated region
      $region21: #{bottleneck_forward.1} parent=11 // pred_check
        %p212 = pneg %p102
      $region22: #{bottleneck_forward.1} parent=11 // pred_check_branch
        %214 = sbr.rel (%p212) target = $region24
      $region23: #{bottleneck_forward.1} parent=11 // pred_region
        _
      $region24: #{bottleneck_forward.1} parent=11 // pred_fallthru
        _
      // Predicated region
      $region25: #{bottleneck_forward.1} parent=11 // pred_check
        %p215 = pneg %p123
      $region26: #{bottleneck_forward.1} parent=11 // pred_check_branch
        %217 = sbr.rel (%p215) target = $region28
      $region27: #{bottleneck_forward.1} parent=11 // pred_region
        _
      $region28: #{bottleneck_forward.1} parent=11 // pred_fallthru
        _
      // Predicated region
      $region29: #{bottleneck_forward.1} parent=11 // pred_check
        %p218 = pneg %p144
      $region30: #{bottleneck_forward.1} parent=11 // pred_check_branch
        %220 = sbr.rel (%p218) target = $region32
      $region31: #{bottleneck_forward.1} parent=11 // pred_region
        _
      $region32: #{bottleneck_forward.1} parent=11 // pred_fallthru
        _
      // Predicated region
      $region33: #{bottleneck_forward.1} parent=11 // pred_check
        %p221 = pneg %p165
      $region34: #{bottleneck_forward.1} parent=11 // pred_check_branch
        %223 = sbr.rel (%p221) target = $region36
      $region35: #{bottleneck_forward.1} parent=11 // pred_region
        _
      $region36: #{bottleneck_forward.1} parent=11 // pred_fallthru
        _
    $region12: #{bottleneck_forward.1} parent=5 // pred_fallthru
      _
    %p224 = scmp.lt.s32.totalorder %s13, 2
    // Predicated region
    $region37: #{bottleneck_forward.1} parent=5 // pred_check
      %p225 = pneg %p224
    $region38: #{bottleneck_forward.1} parent=5 // pred_check_branch
      %227 = sbr.rel (%p225) target = $region40
    $region39: #{bottleneck_forward.1} parent=5 // pred_region
      // Predicated region
      $region41: #{bottleneck_forward.1} parent=39 // pred_check
        %p228 = pneg %p33
      $region42: #{bottleneck_forward.1} parent=39 // pred_check_branch
        %230 = sbr.rel (%p228) target = $region44
      $region43: #{bottleneck_forward.1} parent=39 // pred_region
        %p231 = scmp.lt.s32.totalorder %s13, 1
        %s232 = scalar_select %p231, %s13, 1
        %s233 = smul.addr %s232, 32
        %s234 = smul.addr %s233, 8
        %s235 = scalar_lea.vmem %s0, %s234
      $region44: #{bottleneck_forward.1} parent=39 // pred_fallthru
        _
    $region40: #{bottleneck_forward.1} parent=5 // pred_fallthru
      _
    %p236 = scmp.le.s32.totalorder 1, %s13
    %p237 = scmp.lt.s32.totalorder %s13, 3
    %p238 = pnand %p236, %p237
    %p239 = pneg %p238
    // Predicated region
    $region45: #{bottleneck_forward.1} parent=5 // pred_check
      _
    $region46: #{bottleneck_forward.1} parent=5 // pred_check_branch
      %241 = sbr.rel (%p238) target = $region48
    $region47: #{bottleneck_forward.1} parent=5 // pred_region
      %s242 = ssub.s32 %s13, 1
      %p243 = scmp.lt.s32.totalorder %s18, 1
      %s244 = scalar_select %p243, %s18, 1
      %s245 = smul.addr %s244, 32
      %s246 = smul.addr %s245, 8
      %s247 = scalar_lea.vmem %s0, %s246
      %p248 = pneg %p39
      %p249 = pneg %p36
      %p250 = pneg %p60
      %p251 = pneg %p57
      %p252 = pneg %p81
      %p253 = pneg %p78
      %p254 = pneg %p102
      %p255 = pneg %p99
      %p256 = pneg %p123
      %p257 = pneg %p120
      %p258 = pneg %p144
      %p259 = pneg %p141
      %p260 = pneg %p165
      %p261 = pneg %p162
      %p262 = pneg %p191
      %p263 = pneg %p188
      %p264 = scmp.lt.s32.totalorder %s18, 1
      %s265 = scalar_select %p264, %s18, 1
      %s266 = smul.addr %s265, 32
      %s267 = smul.addr %s266, 8
      %s268 = scalar_lea.vmem %s7, %s267
      %p269 = scmp.lt.s32.totalorder %s18, 1
      %s270 = scalar_select %p269, %s18, 1
      %s271 = smul.addr %s270, 32
      %s272 = smul.addr %s271, 8
      %s273 = scalar_lea.vmem %s0, %s272
      %p274 = scmp.lt.s32.totalorder %s18, 1
      %s275 = scalar_select %p274, %s18, 1
      %s276 = smul.addr %s275, 32
      %s277 = smul.addr %s276, 8
      %s278 = scalar_lea.vmem %s7, %s277
      %v279 = vld [vmem:[%s273] sm:$0xff]
      %v280 = vld [vmem:[%s273 + $0x8] sm:$0xff]
      %v281 = vld [vmem:[%s273 + $0x10] sm:$0xff]
      %v282 = vld [vmem:[%s273 + $0x18] sm:$0xff]
      %v283 = vld [vmem:[%s273 + $0x20] sm:$0xff]
      %v284 = vld [vmem:[%s273 + $0x28] sm:$0xff]
      %v285 = vld [vmem:[%s273 + $0x30] sm:$0xff]
      %v286 = vld [vmem:[%s273 + $0x38] sm:$0xff]
      %v287 = vld [vmem:[%s273 + $0x40] sm:$0xff]
      %v288 = vld [vmem:[%s273 + $0x48] sm:$0xff]
      %v289 = vld [vmem:[%s273 + $0x50] sm:$0xff]
      %v290 = vld [vmem:[%s273 + $0x58] sm:$0xff]
      %v291 = vld [vmem:[%s273 + $0x60] sm:$0xff]
      %v292 = vld [vmem:[%s273 + $0x68] sm:$0xff]
      %v293 = vld [vmem:[%s273 + $0x70] sm:$0xff]
      %v294 = vld [vmem:[%s273 + $0x78] sm:$0xff]
      %v295 = vld [vmem:[%s273 + $0x80] sm:$0xff]
      %v296 = vld [vmem:[%s273 + $0x88] sm:$0xff]
      %v297 = vld [vmem:[%s273 + $0x90] sm:$0xff]
      %v298 = vld [vmem:[%s273 + $0x98] sm:$0xff]
      %v299 = vld [vmem:[%s273 + $0xa0] sm:$0xff]
      %v300 = vld [vmem:[%s273 + $0xa8] sm:$0xff]
      %v301 = vld [vmem:[%s273 + $0xb0] sm:$0xff]
      %v302 = vld [vmem:[%s273 + $0xb8] sm:$0xff]
      %v303 = vld [vmem:[%s273 + $0xc0] sm:$0xff]
      %v304 = vld [vmem:[%s273 + $0xc8] sm:$0xff]
      %v305 = vld [vmem:[%s273 + $0xd0] sm:$0xff]
      %v306 = vld [vmem:[%s273 + $0xd8] sm:$0xff]
      %v307 = vld [vmem:[%s273 + $0xe0] sm:$0xff]
      %v308 = vld [vmem:[%s273 + $0xe8] sm:$0xff]
      %v309 = vld [vmem:[%s273 + $0xf0] sm:$0xff]
      %v310 = vld [vmem:[%s273 + $0xf8] sm:$0xff]
      %v311 = vld [vmem:[%s1] sm:$0xff]
      %v312 = vld [vmem:[%s1 + $0x8] sm:$0xff]
      %v313 = vld [vmem:[%s2] sm:$0x1]
      %v315 = vperm.slane %v313, 0
      %vm317 = vcmask 130048
      %v319 = vsel %vm317, %v279, 0
      %v322 = vsel %vm317, %v280, 0
      %v325 = vsel %vm317, %v281, 0
      %v328 = vsel %vm317, %v282, 0
      %v331 = vsel %vm317, %v283, 0
      %v334 = vsel %vm317, %v284, 0
      %v337 = vsel %vm317, %v285, 0
      %v340 = vsel %vm317, %v286, 0
      %v343 = vsel %vm317, %v287, 0
      %v346 = vsel %vm317, %v288, 0
      %v349 = vsel %vm317, %v289, 0
      %v352 = vsel %vm317, %v290, 0
      %v355 = vsel %vm317, %v291, 0
      %v358 = vsel %vm317, %v292, 0
      %v361 = vsel %vm317, %v293, 0
      %v364 = vsel %vm317, %v294, 0
      %v367 = vsel %vm317, %v295, 0
      %v370 = vsel %vm317, %v296, 0
      %v373 = vsel %vm317, %v297, 0
      %v376 = vsel %vm317, %v298, 0
      %v379 = vsel %vm317, %v299, 0
      %v382 = vsel %vm317, %v300, 0
      %v385 = vsel %vm317, %v301, 0
      %v388 = vsel %vm317, %v302, 0
      %v391 = vsel %vm317, %v303, 0
      %v394 = vsel %vm317, %v304, 0
      %v397 = vsel %vm317, %v305, 0
      %v400 = vsel %vm317, %v306, 0
      %v403 = vsel %vm317, %v307, 0
      %v406 = vsel %vm317, %v308, 0
      %v409 = vsel %vm317, %v309, 0
      %v412 = vsel %vm317, %v310, 0
      %414 = vmatpush.msra.mxu0 0.0
      %415 = vmatpush.msra.mxu0 0.0
      %416 = vmatpush.msra.mxu0 0.0
      %417 = vmatpush.msra.mxu0 0.0
      %418 = vmatpush.msra.mxu0 0.0
      %419 = vmatpush.msra.mxu0 0.0
      %420 = vmatpush.msra.mxu0 0.0
      %421 = vmatpush.msra.mxu0 0.0
      %422 = vmatpush.msra.mxu0 0.0
      %423 = vmatpush.msra.mxu0 0.0
      %424 = vmatpush.msra.mxu0 0.0
      %425 = vmatpush.msra.mxu0 0.0
      %426 = vmatpush.msra.mxu0 0.0
      %427 = vmatpush.msra.mxu0 0.0
      %428 = vmatpush.msra.mxu0 %v312
      %429 = vmatpush.msra.mxu0 %v311
      %430 = vmatmul.f32.gmra.mxu0 %v319
      %v431 = vpop.f32.mrf.mxu0
      %v432 = vadd.f32 %v315, %v431
      %433 = vmatmul.f32.gmra.mxu0 %v322
      %v434 = vpop.f32.mrf.mxu0
      %v435 = vadd.f32 %v315, %v434
      %436 = vmatmul.f32.gmra.mxu0 %v325
      %v437 = vpop.f32.mrf.mxu0
      %v438 = vadd.f32 %v315, %v437
      %439 = vmatmul.f32.gmra.mxu0 %v328
      %v440 = vpop.f32.mrf.mxu0
      %v441 = vadd.f32 %v315, %v440
      %442 = vmatmul.f32.gmra.mxu0 %v331
      %v443 = vpop.f32.mrf.mxu0
      %v444 = vadd.f32 %v315, %v443
      %445 = vmatmul.f32.gmra.mxu0 %v334
      %v446 = vpop.f32.mrf.mxu0
      %v447 = vadd.f32 %v315, %v446
      %448 = vmatmul.f32.gmra.mxu0 %v337
      %v449 = vpop.f32.mrf.mxu0
      %v450 = vadd.f32 %v315, %v449
      %451 = vmatmul.f32.gmra.mxu0 %v340
      %v452 = vpop.f32.mrf.mxu0
      %v453 = vadd.f32 %v315, %v452
      %454 = vmatmul.f32.gmra.mxu0 %v343
      %v455 = vpop.f32.mrf.mxu0
      %v456 = vadd.f32 %v315, %v455
      %457 = vmatmul.f32.gmra.mxu0 %v346
      %v458 = vpop.f32.mrf.mxu0
      %v459 = vadd.f32 %v315, %v458
      %460 = vmatmul.f32.gmra.mxu0 %v349
      %v461 = vpop.f32.mrf.mxu0
      %v462 = vadd.f32 %v315, %v461
      %463 = vmatmul.f32.gmra.mxu0 %v352
      %v464 = vpop.f32.mrf.mxu0
      %v465 = vadd.f32 %v315, %v464
      %466 = vmatmul.f32.gmra.mxu0 %v355
      %v467 = vpop.f32.mrf.mxu0
      %v468 = vadd.f32 %v315, %v467
      %469 = vmatmul.f32.gmra.mxu0 %v358
      %v470 = vpop.f32.mrf.mxu0
      %v471 = vadd.f32 %v315, %v470
      %472 = vmatmul.f32.gmra.mxu0 %v361
      %v473 = vpop.f32.mrf.mxu0
      %v474 = vadd.f32 %v315, %v473
      %475 = vmatmul.f32.gmra.mxu0 %v364
      %v476 = vpop.f32.mrf.mxu0
      %v477 = vadd.f32 %v315, %v476
      %478 = vmatmul.f32.gmra.mxu0 %v367
      %v479 = vpop.f32.mrf.mxu0
      %v480 = vadd.f32 %v315, %v479
      %481 = vmatmul.f32.gmra.mxu0 %v370
      %v482 = vpop.f32.mrf.mxu0
      %v483 = vadd.f32 %v315, %v482
      %484 = vmatmul.f32.gmra.mxu0 %v373
      %v485 = vpop.f32.mrf.mxu0
      %v486 = vadd.f32 %v315, %v485
      %487 = vmatmul.f32.gmra.mxu0 %v376
      %v488 = vpop.f32.mrf.mxu0
      %v489 = vadd.f32 %v315, %v488
      %490 = vmatmul.f32.gmra.mxu0 %v379
      %v491 = vpop.f32.mrf.mxu0
      %v492 = vadd.f32 %v315, %v491
      %493 = vmatmul.f32.gmra.mxu0 %v382
      %v494 = vpop.f32.mrf.mxu0
      %v495 = vadd.f32 %v315, %v494
      %496 = vmatmul.f32.gmra.mxu0 %v385
      %v497 = vpop.f32.mrf.mxu0
      %v498 = vadd.f32 %v315, %v497
      %499 = vmatmul.f32.gmra.mxu0 %v388
      %v500 = vpop.f32.mrf.mxu0
      %v501 = vadd.f32 %v315, %v500
      %502 = vmatmul.f32.gmra.mxu0 %v391
      %v503 = vpop.f32.mrf.mxu0
      %v504 = vadd.f32 %v315, %v503
      %505 = vmatmul.f32.gmra.mxu0 %v394
      %v506 = vpop.f32.mrf.mxu0
      %v507 = vadd.f32 %v315, %v506
      %508 = vmatmul.f32.gmra.mxu0 %v397
      %v509 = vpop.f32.mrf.mxu0
      %v510 = vadd.f32 %v315, %v509
      %511 = vmatmul.f32.gmra.mxu0 %v400
      %v512 = vpop.f32.mrf.mxu0
      %v513 = vadd.f32 %v315, %v512
      %514 = vmatmul.f32.gmra.mxu0 %v403
      %v515 = vpop.f32.mrf.mxu0
      %v516 = vadd.f32 %v315, %v515
      %517 = vmatmul.f32.gmra.mxu0 %v406
      %v518 = vpop.f32.mrf.mxu0
      %v519 = vadd.f32 %v315, %v518
      %520 = vmatmul.f32.gmra.mxu0 %v409
      %v521 = vpop.f32.mrf.mxu0
      %v522 = vadd.f32 %v315, %v521
      %523 = vmatmul.f32.gmra.mxu0 %v412
      %v524 = vpop.f32.mrf.mxu0
      %v525 = vadd.f32 %v315, %v524
      %526 = vdwg.mxu0
      %v527 = vmax.f32 %v432, 0.0
      %v528 = vmax.f32 %v435, 0.0
      %v529 = vmax.f32 %v438, 0.0
      %v530 = vmax.f32 %v441, 0.0
      %v531 = vmax.f32 %v444, 0.0
      %v532 = vmax.f32 %v447, 0.0
      %v533 = vmax.f32 %v450, 0.0
      %v534 = vmax.f32 %v453, 0.0
      %v535 = vmax.f32 %v456, 0.0
      %v536 = vmax.f32 %v459, 0.0
      %v537 = vmax.f32 %v462, 0.0
      %v538 = vmax.f32 %v465, 0.0
      %v539 = vmax.f32 %v468, 0.0
      %v540 = vmax.f32 %v471, 0.0
      %v541 = vmax.f32 %v474, 0.0
      %v542 = vmax.f32 %v477, 0.0
      %v543 = vmax.f32 %v480, 0.0
      %v544 = vmax.f32 %v483, 0.0
      %v545 = vmax.f32 %v486, 0.0
      %v546 = vmax.f32 %v489, 0.0
      %v547 = vmax.f32 %v492, 0.0
      %v548 = vmax.f32 %v495, 0.0
      %v549 = vmax.f32 %v498, 0.0
      %v550 = vmax.f32 %v501, 0.0
      %v551 = vmax.f32 %v504, 0.0
      %v552 = vmax.f32 %v507, 0.0
      %v553 = vmax.f32 %v510, 0.0
      %v554 = vmax.f32 %v513, 0.0
      %v555 = vmax.f32 %v516, 0.0
      %v556 = vmax.f32 %v519, 0.0
      %v557 = vmax.f32 %v522, 0.0
      %v558 = vmax.f32 %v525, 0.0
      %v559 = vlaneseq
      %v560 = vshrl.u32 %v559, 7
      %v561 = vadd.s32 %v560, 8
      %v562 = vadd.s32 %v560, 16
      %v563 = vadd.s32 %v560, 24
      %v564 = vadd.s32 %v560, 32
      %v565 = vadd.s32 %v560, 40
      %v566 = vadd.s32 %v560, 48
      %v567 = vadd.s32 %v560, 56
      %v568 = vadd.s32 %v560, 64
      %v569 = vadd.s32 %v560, 72
      %v570 = vadd.s32 %v560, 80
      %v571 = vadd.s32 %v560, 88
      %v572 = vadd.s32 %v560, 96
      %v573 = vadd.s32 %v560, 104
      %v574 = vadd.s32 %v560, 112
      %v575 = vadd.s32 %v560, 120
      %v576 = vadd.s32 %v560, 128
      %v577 = vadd.s32 %v560, 136
      %v578 = vadd.s32 %v560, 144
      %v579 = vadd.s32 %v560, 152
      %v580 = vadd.s32 %v560, 160
      %v581 = vadd.s32 %v560, 168
      %v582 = vadd.s32 %v560, 176
      %v583 = vadd.s32 %v560, 184
      %v584 = vadd.s32 %v560, 192
      %v585 = vadd.s32 %v560, 200
      %v586 = vadd.s32 %v560, 208
      %v587 = vadd.s32 %v560, 216
      %v588 = vadd.s32 %v560, 224
      %v589 = vadd.s32 %v560, 232
      %v590 = vadd.s32 %v560, 240
      %v591 = vadd.s32 %v560, 248
      %vm592 = vcmp.lt.s32.totalorder %v560, 0
      %v593 = vsub.s32 0, %v560
      %v594 = vsel %vm592, %v593, %v560
      %v595 = vshrl.u32 %v594, 4
      %v596 = vand.u32 %v594, 15
      %v597 = vsub.s32 0, %v596
      %v598 = vsel %vm592, %v597, %v596
      %vm599 = vcmp.lt.s32.totalorder %v561, 0
      %v600 = vsub.s32 0, %v561
      %v601 = vsel %vm599, %v600, %v561
      %v602 = vshrl.u32 %v601, 4
      %v603 = vand.u32 %v601, 15
      %v604 = vsub.s32 0, %v603
      %v605 = vsel %vm599, %v604, %v603
      %vm606 = vcmp.lt.s32.totalorder %v562, 0
      %v607 = vsub.s32 0, %v562
      %v608 = vsel %vm606, %v607, %v562
      %v609 = vshrl.u32 %v608, 4
      %v610 = vand.u32 %v608, 15
      %v611 = vsub.s32 0, %v610
      %v612 = vsel %vm606, %v611, %v610
      %vm613 = vcmp.lt.s32.totalorder %v563, 0
      %v614 = vsub.s32 0, %v563
      %v615 = vsel %vm613, %v614, %v563
      %v616 = vshrl.u32 %v615, 4
      %v617 = vand.u32 %v615, 15
      %v618 = vsub.s32 0, %v617
      %v619 = vsel %vm613, %v618, %v617
      %vm620 = vcmp.lt.s32.totalorder %v564, 0
      %v621 = vsub.s32 0, %v564
      %v622 = vsel %vm620, %v621, %v564
      %v623 = vshrl.u32 %v622, 4
      %v624 = vand.u32 %v622, 15
      %v625 = vsub.s32 0, %v624
      %v626 = vsel %vm620, %v625, %v624
      %vm627 = vcmp.lt.s32.totalorder %v565, 0
      %v628 = vsub.s32 0, %v565
      %v629 = vsel %vm627, %v628, %v565
      %v630 = vshrl.u32 %v629, 4
      %v631 = vand.u32 %v629, 15
      %v632 = vsub.s32 0, %v631
      %v633 = vsel %vm627, %v632, %v631
      %vm634 = vcmp.lt.s32.totalorder %v566, 0
      %v635 = vsub.s32 0, %v566
      %v636 = vsel %vm634, %v635, %v566
      %v637 = vshrl.u32 %v636, 4
      %v638 = vand.u32 %v636, 15
      %v639 = vsub.s32 0, %v638
      %v640 = vsel %vm634, %v639, %v638
      %vm641 = vcmp.lt.s32.totalorder %v567, 0
      %v642 = vsub.s32 0, %v567
      %v643 = vsel %vm641, %v642, %v567
      %v644 = vshrl.u32 %v643, 4
      %v645 = vand.u32 %v643, 15
      %v646 = vsub.s32 0, %v645
      %v647 = vsel %vm641, %v646, %v645
      %vm648 = vcmp.lt.s32.totalorder %v568, 0
      %v649 = vsub.s32 0, %v568
      %v650 = vsel %vm648, %v649, %v568
      %v651 = vshrl.u32 %v650, 4
      %v652 = vand.u32 %v650, 15
      %v653 = vsub.s32 0, %v652
      %v654 = vsel %vm648, %v653, %v652
      %vm655 = vcmp.lt.s32.totalorder %v569, 0
      %v656 = vsub.s32 0, %v569
      %v657 = vsel %vm655, %v656, %v569
      %v658 = vshrl.u32 %v657, 4
      %v659 = vand.u32 %v657, 15
      %v660 = vsub.s32 0, %v659
      %v661 = vsel %vm655, %v660, %v659
      %vm662 = vcmp.lt.s32.totalorder %v570, 0
      %v663 = vsub.s32 0, %v570
      %v664 = vsel %vm662, %v663, %v570
      %v665 = vshrl.u32 %v664, 4
      %v666 = vand.u32 %v664, 15
      %v667 = vsub.s32 0, %v666
      %v668 = vsel %vm662, %v667, %v666
      %vm669 = vcmp.lt.s32.totalorder %v571, 0
      %v670 = vsub.s32 0, %v571
      %v671 = vsel %vm669, %v670, %v571
      %v672 = vshrl.u32 %v671, 4
      %v673 = vand.u32 %v671, 15
      %v674 = vsub.s32 0, %v673
      %v675 = vsel %vm669, %v674, %v673
      %vm676 = vcmp.lt.s32.totalorder %v572, 0
      %v677 = vsub.s32 0, %v572
      %v678 = vsel %vm676, %v677, %v572
      %v679 = vshrl.u32 %v678, 4
      %v680 = vand.u32 %v678, 15
      %v681 = vsub.s32 0, %v680
      %v682 = vsel %vm676, %v681, %v680
      %vm683 = vcmp.lt.s32.totalorder %v573, 0
      %v684 = vsub.s32 0, %v573
      %v685 = vsel %vm683, %v684, %v573
      %v686 = vshrl.u32 %v685, 4
      %v687 = vand.u32 %v685, 15
      %v688 = vsub.s32 0, %v687
      %v689 = vsel %vm683, %v688, %v687
      %vm690 = vcmp.lt.s32.totalorder %v574, 0
      %v691 = vsub.s32 0, %v574
      %v692 = vsel %vm690, %v691, %v574
      %v693 = vshrl.u32 %v692, 4
      %v694 = vand.u32 %v692, 15
      %v695 = vsub.s32 0, %v694
      %v696 = vsel %vm690, %v695, %v694
      %vm697 = vcmp.lt.s32.totalorder %v575, 0
      %v698 = vsub.s32 0, %v575
      %v699 = vsel %vm697, %v698, %v575
      %v700 = vshrl.u32 %v699, 4
      %v701 = vand.u32 %v699, 15
      %v702 = vsub.s32 0, %v701
      %v703 = vsel %vm697, %v702, %v701
      %vm704 = vcmp.lt.s32.totalorder %v576, 0
      %v705 = vsub.s32 0, %v576
      %v706 = vsel %vm704, %v705, %v576
      %v707 = vshrl.u32 %v706, 4
      %v708 = vand.u32 %v706, 15
      %v709 = vsub.s32 0, %v708
      %v710 = vsel %vm704, %v709, %v708
      %vm711 = vcmp.lt.s32.totalorder %v577, 0
      %v712 = vsub.s32 0, %v577
      %v713 = vsel %vm711, %v712, %v577
      %v714 = vshrl.u32 %v713, 4
      %v715 = vand.u32 %v713, 15
      %v716 = vsub.s32 0, %v715
      %v717 = vsel %vm711, %v716, %v715
      %vm718 = vcmp.lt.s32.totalorder %v578, 0
      %v719 = vsub.s32 0, %v578
      %v720 = vsel %vm718, %v719, %v578
      %v721 = vshrl.u32 %v720, 4
      %v722 = vand.u32 %v720, 15
      %v723 = vsub.s32 0, %v722
      %v724 = vsel %vm718, %v723, %v722
      %vm725 = vcmp.lt.s32.totalorder %v579, 0
      %v726 = vsub.s32 0, %v579
      %v727 = vsel %vm725, %v726, %v579
      %v728 = vshrl.u32 %v727, 4
      %v729 = vand.u32 %v727, 15
      %v730 = vsub.s32 0, %v729
      %v731 = vsel %vm725, %v730, %v729
      %vm732 = vcmp.lt.s32.totalorder %v580, 0
      %v733 = vsub.s32 0, %v580
      %v734 = vsel %vm732, %v733, %v580
      %v735 = vshrl.u32 %v734, 4
      %v736 = vand.u32 %v734, 15
      %v737 = vsub.s32 0, %v736
      %v738 = vsel %vm732, %v737, %v736
      %vm739 = vcmp.lt.s32.totalorder %v581, 0
      %v740 = vsub.s32 0, %v581
      %v741 = vsel %vm739, %v740, %v581
      %v742 = vshrl.u32 %v741, 4
      %v743 = vand.u32 %v741, 15
      %v744 = vsub.s32 0, %v743
      %v745 = vsel %vm739, %v744, %v743
      %vm746 = vcmp.lt.s32.totalorder %v582, 0
      %v747 = vsub.s32 0, %v582
      %v748 = vsel %vm746, %v747, %v582
      %v749 = vshrl.u32 %v748, 4
      %v750 = vand.u32 %v748, 15
      %v751 = vsub.s32 0, %v750
      %v752 = vsel %vm746, %v751, %v750
      %vm753 = vcmp.lt.s32.totalorder %v583, 0
      %v754 = vsub.s32 0, %v583
      %v755 = vsel %vm753, %v754, %v583
      %v756 = vshrl.u32 %v755, 4
      %v757 = vand.u32 %v755, 15
      %v758 = vsub.s32 0, %v757
      %v759 = vsel %vm753, %v758, %v757
      %vm760 = vcmp.lt.s32.totalorder %v584, 0
      %v761 = vsub.s32 0, %v584
      %v762 = vsel %vm760, %v761, %v584
      %v763 = vshrl.u32 %v762, 4
      %v764 = vand.u32 %v762, 15
      %v765 = vsub.s32 0, %v764
      %v766 = vsel %vm760, %v765, %v764
      %vm767 = vcmp.lt.s32.totalorder %v585, 0
      %v768 = vsub.s32 0, %v585
      %v769 = vsel %vm767, %v768, %v585
      %v770 = vshrl.u32 %v769, 4
      %v771 = vand.u32 %v769, 15
      %v772 = vsub.s32 0, %v771
      %v773 = vsel %vm767, %v772, %v771
      %vm774 = vcmp.lt.s32.totalorder %v586, 0
      %v775 = vsub.s32 0, %v586
      %v776 = vsel %vm774, %v775, %v586
      %v777 = vshrl.u32 %v776, 4
      %v778 = vand.u32 %v776, 15
      %v779 = vsub.s32 0, %v778
      %v780 = vsel %vm774, %v779, %v778
      %vm781 = vcmp.lt.s32.totalorder %v587, 0
      %v782 = vsub.s32 0, %v587
      %v783 = vsel %vm781, %v782, %v587
      %v784 = vshrl.u32 %v783, 4
      %v785 = vand.u32 %v783, 15
      %v786 = vsub.s32 0, %v785
      %v787 = vsel %vm781, %v786, %v785
      %vm788 = vcmp.lt.s32.totalorder %v588, 0
      %v789 = vsub.s32 0, %v588
      %v790 = vsel %vm788, %v789, %v588
      %v791 = vshrl.u32 %v790, 4
      %v792 = vand.u32 %v790, 15
      %v793 = vsub.s32 0, %v792
      %v794 = vsel %vm788, %v793, %v792
      %vm795 = vcmp.lt.s32.totalorder %v589, 0
      %v796 = vsub.s32 0, %v589
      %v797 = vsel %vm795, %v796, %v589
      %v798 = vshrl.u32 %v797, 4
      %v799 = vand.u32 %v797, 15
      %v800 = vsub.s32 0, %v799
      %v801 = vsel %vm795, %v800, %v799
      %vm802 = vcmp.lt.s32.totalorder %v590, 0
      %v803 = vsub.s32 0, %v590
      %v804 = vsel %vm802, %v803, %v590
      %v805 = vshrl.u32 %v804, 4
      %v806 = vand.u32 %v804, 15
      %v807 = vsub.s32 0, %v806
      %v808 = vsel %vm802, %v807, %v806
      %vm809 = vcmp.lt.s32.totalorder %v591, 0
      %v810 = vsub.s32 0, %v591
      %v811 = vsel %vm809, %v810, %v591
      %v812 = vshrl.u32 %v811, 4
      %v813 = vand.u32 %v811, 15
      %v814 = vsub.s32 0, %v813
      %v815 = vsel %vm809, %v814, %v813
      %vm816 = vcmp.ne.s32.totalorder %v598, 0
      %vm817 = vcmp.ne.s32.totalorder %v605, 0
      %vm818 = vcmp.ne.s32.totalorder %v612, 0
      %vm819 = vcmp.ne.s32.totalorder %v619, 0
      %vm820 = vcmp.ne.s32.totalorder %v626, 0
      %vm821 = vcmp.ne.s32.totalorder %v633, 0
      %vm822 = vcmp.ne.s32.totalorder %v640, 0
      %vm823 = vcmp.ne.s32.totalorder %v647, 0
      %vm824 = vcmp.ne.s32.totalorder %v654, 0
      %vm825 = vcmp.ne.s32.totalorder %v661, 0
      %vm826 = vcmp.ne.s32.totalorder %v668, 0
      %vm827 = vcmp.ne.s32.totalorder %v675, 0
      %vm828 = vcmp.ne.s32.totalorder %v682, 0
      %vm829 = vcmp.ne.s32.totalorder %v689, 0
      %vm830 = vcmp.ne.s32.totalorder %v696, 0
      %vm831 = vcmp.ne.s32.totalorder %v703, 0
      %vm832 = vcmp.ne.s32.totalorder %v710, 0
      %vm833 = vcmp.ne.s32.totalorder %v717, 0
      %vm834 = vcmp.ne.s32.totalorder %v724, 0
      %vm835 = vcmp.ne.s32.totalorder %v731, 0
      %vm836 = vcmp.ne.s32.totalorder %v738, 0
      %vm837 = vcmp.ne.s32.totalorder %v745, 0
      %vm838 = vcmp.ne.s32.totalorder %v752, 0
      %vm839 = vcmp.ne.s32.totalorder %v759, 0
      %vm840 = vcmp.ne.s32.totalorder %v766, 0
      %vm841 = vcmp.ne.s32.totalorder %v773, 0
      %vm842 = vcmp.ne.s32.totalorder %v780, 0
      %vm843 = vcmp.ne.s32.totalorder %v787, 0
      %vm844 = vcmp.ne.s32.totalorder %v794, 0
      %vm845 = vcmp.ne.s32.totalorder %v801, 0
      %vm846 = vcmp.ne.s32.totalorder %v808, 0
      %vm847 = vcmp.ne.s32.totalorder %v815, 0
      %vm848 = vcmp.lt.s32.totalorder %v598, 0
      %vm849 = vcmp.lt.s32.totalorder %v605, 0
      %vm850 = vcmp.lt.s32.totalorder %v612, 0
      %vm851 = vcmp.lt.s32.totalorder %v619, 0
      %vm852 = vcmp.lt.s32.totalorder %v626, 0
      %vm853 = vcmp.lt.s32.totalorder %v633, 0
      %vm854 = vcmp.lt.s32.totalorder %v640, 0
      %vm855 = vcmp.lt.s32.totalorder %v647, 0
      %vm856 = vcmp.lt.s32.totalorder %v654, 0
      %vm857 = vcmp.lt.s32.totalorder %v661, 0
      %vm858 = vcmp.lt.s32.totalorder %v668, 0
      %vm859 = vcmp.lt.s32.totalorder %v675, 0
      %vm860 = vcmp.lt.s32.totalorder %v682, 0
      %vm861 = vcmp.lt.s32.totalorder %v689, 0
      %vm862 = vcmp.lt.s32.totalorder %v696, 0
      %vm863 = vcmp.lt.s32.totalorder %v703, 0
      %vm864 = vcmp.lt.s32.totalorder %v710, 0
      %vm865 = vcmp.lt.s32.totalorder %v717, 0
      %vm866 = vcmp.lt.s32.totalorder %v724, 0
      %vm867 = vcmp.lt.s32.totalorder %v731, 0
      %vm868 = vcmp.lt.s32.totalorder %v738, 0
      %vm869 = vcmp.lt.s32.totalorder %v745, 0
      %vm870 = vcmp.lt.s32.totalorder %v752, 0
      %vm871 = vcmp.lt.s32.totalorder %v759, 0
      %vm872 = vcmp.lt.s32.totalorder %v766, 0
      %vm873 = vcmp.lt.s32.totalorder %v773, 0
      %vm874 = vcmp.lt.s32.totalorder %v780, 0
      %vm875 = vcmp.lt.s32.totalorder %v787, 0
      %vm876 = vcmp.lt.s32.totalorder %v794, 0
      %vm877 = vcmp.lt.s32.totalorder %v801, 0
      %vm878 = vcmp.lt.s32.totalorder %v808, 0
      %vm879 = vcmp.lt.s32.totalorder %v815, 0
      %vm880 = vmand %vm848, %vm816
      %vm881 = vmand %vm849, %vm817
      %vm882 = vmand %vm850, %vm818
      %vm883 = vmand %vm851, %vm819
      %vm884 = vmand %vm852, %vm820
      %vm885 = vmand %vm853, %vm821
      %vm886 = vmand %vm854, %vm822
      %vm887 = vmand %vm855, %vm823
      %vm888 = vmand %vm856, %vm824
      %vm889 = vmand %vm857, %vm825
      %vm890 = vmand %vm858, %vm826
      %vm891 = vmand %vm859, %vm827
      %vm892 = vmand %vm860, %vm828
      %vm893 = vmand %vm861, %vm829
      %vm894 = vmand %vm862, %vm830
      %vm895 = vmand %vm863, %vm831
      %vm896 = vmand %vm864, %vm832
      %vm897 = vmand %vm865, %vm833
      %vm898 = vmand %vm866, %vm834
      %vm899 = vmand %vm867, %vm835
      %vm900 = vmand %vm868, %vm836
      %vm901 = vmand %vm869, %vm837
      %vm902 = vmand %vm870, %vm838
      %vm903 = vmand %vm871, %vm839
      %vm904 = vmand %vm872, %vm840
      %vm905 = vmand %vm873, %vm841
      %vm906 = vmand %vm874, %vm842
      %vm907 = vmand %vm875, %vm843
      %vm908 = vmand %vm876, %vm844
      %vm909 = vmand %vm877, %vm845
      %vm910 = vmand %vm878, %vm846
      %vm911 = vmand %vm879, %vm847
      %v912 = vadd.s32 %v598, 16
      %v913 = vadd.s32 %v605, 16
      %v914 = vadd.s32 %v612, 16
      %v915 = vadd.s32 %v619, 16
      %v916 = vadd.s32 %v626, 16
      %v917 = vadd.s32 %v633, 16
      %v918 = vadd.s32 %v640, 16
      %v919 = vadd.s32 %v647, 16
      %v920 = vadd.s32 %v654, 16
      %v921 = vadd.s32 %v661, 16
      %v922 = vadd.s32 %v668, 16
      %v923 = vadd.s32 %v675, 16
      %v924 = vadd.s32 %v682, 16
      %v925 = vadd.s32 %v689, 16
      %v926 = vadd.s32 %v696, 16
      %v927 = vadd.s32 %v703, 16
      %v928 = vadd.s32 %v710, 16
      %v929 = vadd.s32 %v717, 16
      %v930 = vadd.s32 %v724, 16
      %v931 = vadd.s32 %v731, 16
      %v932 = vadd.s32 %v738, 16
      %v933 = vadd.s32 %v745, 16
      %v934 = vadd.s32 %v752, 16
      %v935 = vadd.s32 %v759, 16
      %v936 = vadd.s32 %v766, 16
      %v937 = vadd.s32 %v773, 16
      %v938 = vadd.s32 %v780, 16
      %v939 = vadd.s32 %v787, 16
      %v940 = vadd.s32 %v794, 16
      %v941 = vadd.s32 %v801, 16
      %v942 = vadd.s32 %v808, 16
      %v943 = vadd.s32 %v815, 16
      %v944 = vsel %vm880, %v912, %v598
      %v945 = vsel %vm881, %v913, %v605
      %v946 = vsel %vm882, %v914, %v612
      %v947 = vsel %vm883, %v915, %v619
      %v948 = vsel %vm884, %v916, %v626
      %v949 = vsel %vm885, %v917, %v633
      %v950 = vsel %vm886, %v918, %v640
      %v951 = vsel %vm887, %v919, %v647
      %v952 = vsel %vm888, %v920, %v654
      %v953 = vsel %vm889, %v921, %v661
      %v954 = vsel %vm890, %v922, %v668
      %v955 = vsel %vm891, %v923, %v675
      %v956 = vsel %vm892, %v924, %v682
      %v957 = vsel %vm893, %v925, %v689
      %v958 = vsel %vm894, %v926, %v696
      %v959 = vsel %vm895, %v927, %v703
      %v960 = vsel %vm896, %v928, %v710
      %v961 = vsel %vm897, %v929, %v717
      %v962 = vsel %vm898, %v930, %v724
      %v963 = vsel %vm899, %v931, %v731
      %v964 = vsel %vm900, %v932, %v738
      %v965 = vsel %vm901, %v933, %v745
      %v966 = vsel %vm902, %v934, %v752
      %v967 = vsel %vm903, %v935, %v759
      %v968 = vsel %vm904, %v936, %v766
      %v969 = vsel %vm905, %v937, %v773
      %v970 = vsel %vm906, %v938, %v780
      %v971 = vsel %vm907, %v939, %v787
      %v972 = vsel %vm908, %v940, %v794
      %v973 = vsel %vm909, %v941, %v801
      %v974 = vsel %vm910, %v942, %v808
      %v975 = vsel %vm911, %v943, %v815
      %vm976 = vcmp.ge.s32.totalorder %v944, 1
      %vm977 = vcmp.ge.s32.totalorder %v945, 1
      %vm978 = vcmp.ge.s32.totalorder %v946, 1
      %vm979 = vcmp.ge.s32.totalorder %v947, 1
      %vm980 = vcmp.ge.s32.totalorder %v948, 1
      %vm981 = vcmp.ge.s32.totalorder %v949, 1
      %vm982 = vcmp.ge.s32.totalorder %v950, 1
      %vm983 = vcmp.ge.s32.totalorder %v951, 1
      %vm984 = vcmp.ge.s32.totalorder %v952, 1
      %vm985 = vcmp.ge.s32.totalorder %v953, 1
      %vm986 = vcmp.ge.s32.totalorder %v954, 1
      %vm987 = vcmp.ge.s32.totalorder %v955, 1
      %vm988 = vcmp.ge.s32.totalorder %v956, 1
      %vm989 = vcmp.ge.s32.totalorder %v957, 1
      %vm990 = vcmp.ge.s32.totalorder %v958, 1
      %vm991 = vcmp.ge.s32.totalorder %v959, 1
      %vm992 = vcmp.ge.s32.totalorder %v960, 1
      %vm993 = vcmp.ge.s32.totalorder %v961, 1
      %vm994 = vcmp.ge.s32.totalorder %v962, 1
      %vm995 = vcmp.ge.s32.totalorder %v963, 1
      %vm996 = vcmp.ge.s32.totalorder %v964, 1
      %vm997 = vcmp.ge.s32.totalorder %v965, 1
      %vm998 = vcmp.ge.s32.totalorder %v966, 1
      %vm999 = vcmp.ge.s32.totalorder %v967, 1
      %vm1000 = vcmp.ge.s32.totalorder %v968, 1
      %vm1001 = vcmp.ge.s32.totalorder %v969, 1
      %vm1002 = vcmp.ge.s32.totalorder %v970, 1
      %vm1003 = vcmp.ge.s32.totalorder %v971, 1
      %vm1004 = vcmp.ge.s32.totalorder %v972, 1
      %vm1005 = vcmp.ge.s32.totalorder %v973, 1
      %vm1006 = vcmp.ge.s32.totalorder %v974, 1
      %vm1007 = vcmp.ge.s32.totalorder %v975, 1
      %vm1008 = vcmp.lt.s32.totalorder %v944, 15
      %vm1009 = vcmp.lt.s32.totalorder %v945, 15
      %vm1010 = vcmp.lt.s32.totalorder %v946, 15
      %vm1011 = vcmp.lt.s32.totalorder %v947, 15
      %vm1012 = vcmp.lt.s32.totalorder %v948, 15
      %vm1013 = vcmp.lt.s32.totalorder %v949, 15
      %vm1014 = vcmp.lt.s32.totalorder %v950, 15
      %vm1015 = vcmp.lt.s32.totalorder %v951, 15
      %vm1016 = vcmp.lt.s32.totalorder %v952, 15
      %vm1017 = vcmp.lt.s32.totalorder %v953, 15
      %vm1018 = vcmp.lt.s32.totalorder %v954, 15
      %vm1019 = vcmp.lt.s32.totalorder %v955, 15
      %vm1020 = vcmp.lt.s32.totalorder %v956, 15
      %vm1021 = vcmp.lt.s32.totalorder %v957, 15
      %vm1022 = vcmp.lt.s32.totalorder %v958, 15
      %vm1023 = vcmp.lt.s32.totalorder %v959, 15
      %vm1024 = vcmp.lt.s32.totalorder %v960, 15
      %vm1025 = vcmp.lt.s32.totalorder %v961, 15
      %vm1026 = vcmp.lt.s32.totalorder %v962, 15
      %vm1027 = vcmp.lt.s32.totalorder %v963, 15
      %vm1028 = vcmp.lt.s32.totalorder %v964, 15
      %vm1029 = vcmp.lt.s32.totalorder %v965, 15
      %vm1030 = vcmp.lt.s32.totalorder %v966, 15
      %vm1031 = vcmp.lt.s32.totalorder %v967, 15
      %vm1032 = vcmp.lt.s32.totalorder %v968, 15
      %vm1033 = vcmp.lt.s32.totalorder %v969, 15
      %vm1034 = vcmp.lt.s32.totalorder %v970, 15
      %vm1035 = vcmp.lt.s32.totalorder %v971, 15
      %vm1036 = vcmp.lt.s32.totalorder %v972, 15
      %vm1037 = vcmp.lt.s32.totalorder %v973, 15
      %vm1038 = vcmp.lt.s32.totalorder %v974, 15
      %vm1039 = vcmp.lt.s32.totalorder %v975, 15
      %v1041 = vrot.slane %v558, 7
      %vm1074 = vcmask 1040384
      %v1075 = vrot.slane %v527, 7
      %v1076 = vrot.slane %v528, 7
      %v1077 = vsel %vm1074, %v1075, %v1076
      %v1078 = vrot.slane %v529, 7
      %v1079 = vsel %vm1074, %v1076, %v1078
      %v1080 = vrot.slane %v530, 7
      %v1081 = vsel %vm1074, %v1078, %v1080
      %v1082 = vrot.slane %v531, 7
      %v1083 = vsel %vm1074, %v1080, %v1082
      %v1084 = vrot.slane %v532, 7
      %v1085 = vsel %vm1074, %v1082, %v1084
      %v1086 = vrot.slane %v533, 7
      %v1087 = vsel %vm1074, %v1084, %v1086
      %v1088 = vrot.slane %v534, 7
      %v1089 = vsel %vm1074, %v1086, %v1088
      %v1090 = vrot.slane %v535, 7
      %v1091 = vsel %vm1074, %v1088, %v1090
      %v1092 = vrot.slane %v536, 7
      %v1093 = vsel %vm1074, %v1090, %v1092
      %v1094 = vrot.slane %v537, 7
      %v1095 = vsel %vm1074, %v1092, %v1094
      %v1096 = vrot.slane %v538, 7
      %v1097 = vsel %vm1074, %v1094, %v1096
      %v1098 = vrot.slane %v539, 7
      %v1099 = vsel %vm1074, %v1096, %v1098
      %v1100 = vrot.slane %v540, 7
      %v1101 = vsel %vm1074, %v1098, %v1100
      %v1102 = vrot.slane %v541, 7
      %v1103 = vsel %vm1074, %v1100, %v1102
      %v1104 = vrot.slane %v542, 7
      %v1105 = vsel %vm1074, %v1102, %v1104
      %v1106 = vrot.slane %v543, 7
      %v1107 = vsel %vm1074, %v1104, %v1106
      %v1108 = vrot.slane %v544, 7
      %v1109 = vsel %vm1074, %v1106, %v1108
      %v1110 = vrot.slane %v545, 7
      %v1111 = vsel %vm1074, %v1108, %v1110
      %v1112 = vrot.slane %v546, 7
      %v1113 = vsel %vm1074, %v1110, %v1112
      %v1114 = vrot.slane %v547, 7
      %v1115 = vsel %vm1074, %v1112, %v1114
      %v1116 = vrot.slane %v548, 7
      %v1117 = vsel %vm1074, %v1114, %v1116
      %v1118 = vrot.slane %v549, 7
      %v1119 = vsel %vm1074, %v1116, %v1118
      %v1120 = vrot.slane %v550, 7
      %v1121 = vsel %vm1074, %v1118, %v1120
      %v1122 = vrot.slane %v551, 7
      %v1123 = vsel %vm1074, %v1120, %v1122
      %v1124 = vrot.slane %v552, 7
      %v1125 = vsel %vm1074, %v1122, %v1124
      %v1126 = vrot.slane %v553, 7
      %v1127 = vsel %vm1074, %v1124, %v1126
      %v1128 = vrot.slane %v554, 7
      %v1129 = vsel %vm1074, %v1126, %v1128
      %v1130 = vrot.slane %v555, 7
      %v1131 = vsel %vm1074, %v1128, %v1130
      %v1132 = vrot.slane %v556, 7
      %v1133 = vsel %vm1074, %v1130, %v1132
      %v1134 = vrot.slane %v557, 7
      %v1135 = vsel %vm1074, %v1132, %v1134
      %v1136 = vsel %vm1074, %v1134, %v1041
      %v1169 = vsel %vm1074, %v1041, %v1075
      %v1170 = vsel %vm976, 1, 0
      %v1171 = vsel %vm977, 1, 0
      %v1172 = vsel %vm978, 1, 0
      %v1173 = vsel %vm979, 1, 0
      %v1174 = vsel %vm980, 1, 0
      %v1175 = vsel %vm981, 1, 0
      %v1176 = vsel %vm982, 1, 0
      %v1177 = vsel %vm983, 1, 0
      %v1178 = vsel %vm984, 1, 0
      %v1179 = vsel %vm985, 1, 0
      %v1180 = vsel %vm986, 1, 0
      %v1181 = vsel %vm987, 1, 0
      %v1182 = vsel %vm988, 1, 0
      %v1183 = vsel %vm989, 1, 0
      %v1184 = vsel %vm990, 1, 0
      %v1185 = vsel %vm991, 1, 0
      %v1186 = vsel %vm992, 1, 0
      %v1187 = vsel %vm993, 1, 0
      %v1188 = vsel %vm994, 1, 0
      %v1189 = vsel %vm995, 1, 0
      %v1190 = vsel %vm996, 1, 0
      %v1191 = vsel %vm997, 1, 0
      %v1192 = vsel %vm998, 1, 0
      %v1193 = vsel %vm999, 1, 0
      %v1194 = vsel %vm1000, 1, 0
      %v1195 = vsel %vm1001, 1, 0
      %v1196 = vsel %vm1002, 1, 0
      %v1197 = vsel %vm1003, 1, 0
      %v1198 = vsel %vm1004, 1, 0
      %v1199 = vsel %vm1005, 1, 0
      %v1200 = vsel %vm1006, 1, 0
      %v1201 = vsel %vm1007, 1, 0
      %vm1202 = vcmp.eq.s32.totalorder %v1170, 1
      %vm1203 = vcmp.eq.s32.totalorder %v1171, 1
      %vm1204 = vcmp.eq.s32.totalorder %v1172, 1
      %vm1205 = vcmp.eq.s32.totalorder %v1173, 1
      %vm1206 = vcmp.eq.s32.totalorder %v1174, 1
      %vm1207 = vcmp.eq.s32.totalorder %v1175, 1
      %vm1208 = vcmp.eq.s32.totalorder %v1176, 1
      %vm1209 = vcmp.eq.s32.totalorder %v1177, 1
      %vm1210 = vcmp.eq.s32.totalorder %v1178, 1
      %vm1211 = vcmp.eq.s32.totalorder %v1179, 1
      %vm1212 = vcmp.eq.s32.totalorder %v1180, 1
      %vm1213 = vcmp.eq.s32.totalorder %v1181, 1
      %vm1214 = vcmp.eq.s32.totalorder %v1182, 1
      %vm1215 = vcmp.eq.s32.totalorder %v1183, 1
      %vm1216 = vcmp.eq.s32.totalorder %v1184, 1
      %vm1217 = vcmp.eq.s32.totalorder %v1185, 1
      %vm1218 = vcmp.eq.s32.totalorder %v1186, 1
      %vm1219 = vcmp.eq.s32.totalorder %v1187, 1
      %vm1220 = vcmp.eq.s32.totalorder %v1188, 1
      %vm1221 = vcmp.eq.s32.totalorder %v1189, 1
      %vm1222 = vcmp.eq.s32.totalorder %v1190, 1
      %vm1223 = vcmp.eq.s32.totalorder %v1191, 1
      %vm1224 = vcmp.eq.s32.totalorder %v1192, 1
      %vm1225 = vcmp.eq.s32.totalorder %v1193, 1
      %vm1226 = vcmp.eq.s32.totalorder %v1194, 1
      %vm1227 = vcmp.eq.s32.totalorder %v1195, 1
      %vm1228 = vcmp.eq.s32.totalorder %v1196, 1
      %vm1229 = vcmp.eq.s32.totalorder %v1197, 1
      %vm1230 = vcmp.eq.s32.totalorder %v1198, 1
      %vm1231 = vcmp.eq.s32.totalorder %v1199, 1
      %vm1232 = vcmp.eq.s32.totalorder %v1200, 1
      %vm1233 = vcmp.eq.s32.totalorder %v1201, 1
      %v1234 = vsel %vm1202, %v1169, 0.0
      %v1235 = vsel %vm1203, %v1077, 0.0
      %v1236 = vsel %vm1204, %v1079, 0.0
      %v1237 = vsel %vm1205, %v1081, 0.0
      %v1238 = vsel %vm1206, %v1083, 0.0
      %v1239 = vsel %vm1207, %v1085, 0.0
      %v1240 = vsel %vm1208, %v1087, 0.0
      %v1241 = vsel %vm1209, %v1089, 0.0
      %v1242 = vsel %vm1210, %v1091, 0.0
      %v1243 = vsel %vm1211, %v1093, 0.0
      %v1244 = vsel %vm1212, %v1095, 0.0
      %v1245 = vsel %vm1213, %v1097, 0.0
      %v1246 = vsel %vm1214, %v1099, 0.0
      %v1247 = vsel %vm1215, %v1101, 0.0
      %v1248 = vsel %vm1216, %v1103, 0.0
      %v1249 = vsel %vm1217, %v1105, 0.0
      %v1250 = vsel %vm1218, %v1107, 0.0
      %v1251 = vsel %vm1219, %v1109, 0.0
      %v1252 = vsel %vm1220, %v1111, 0.0
      %v1253 = vsel %vm1221, %v1113, 0.0
      %v1254 = vsel %vm1222, %v1115, 0.0
      %v1255 = vsel %vm1223, %v1117, 0.0
      %v1256 = vsel %vm1224, %v1119, 0.0
      %v1257 = vsel %vm1225, %v1121, 0.0
      %v1258 = vsel %vm1226, %v1123, 0.0
      %v1259 = vsel %vm1227, %v1125, 0.0
      %v1260 = vsel %vm1228, %v1127, 0.0
      %v1261 = vsel %vm1229, %v1129, 0.0
      %v1262 = vsel %vm1230, %v1131, 0.0
      %v1263 = vsel %vm1231, %v1133, 0.0
      %v1264 = vsel %vm1232, %v1135, 0.0
      %v1265 = vsel %vm1233, %v1136, 0.0
      %vm1266 = vcmask 1046528
      %v1267 = vrot.slane %v527, 1
      %v1268 = vrot.slane %v528, 1
      %v1269 = vsel %vm1266, %v1267, %v1268
      %v1270 = vrot.slane %v529, 1
      %v1271 = vsel %vm1266, %v1268, %v1270
      %v1272 = vrot.slane %v530, 1
      %v1273 = vsel %vm1266, %v1270, %v1272
      %v1274 = vrot.slane %v531, 1
      %v1275 = vsel %vm1266, %v1272, %v1274
      %v1276 = vrot.slane %v532, 1
      %v1277 = vsel %vm1266, %v1274, %v1276
      %v1278 = vrot.slane %v533, 1
      %v1279 = vsel %vm1266, %v1276, %v1278
      %v1280 = vrot.slane %v534, 1
      %v1281 = vsel %vm1266, %v1278, %v1280
      %v1282 = vrot.slane %v535, 1
      %v1283 = vsel %vm1266, %v1280, %v1282
      %v1284 = vrot.slane %v536, 1
      %v1285 = vsel %vm1266, %v1282, %v1284
      %v1286 = vrot.slane %v537, 1
      %v1287 = vsel %vm1266, %v1284, %v1286
      %v1288 = vrot.slane %v538, 1
      %v1289 = vsel %vm1266, %v1286, %v1288
      %v1290 = vrot.slane %v539, 1
      %v1291 = vsel %vm1266, %v1288, %v1290
      %v1292 = vrot.slane %v540, 1
      %v1293 = vsel %vm1266, %v1290, %v1292
      %v1294 = vrot.slane %v541, 1
      %v1295 = vsel %vm1266, %v1292, %v1294
      %v1296 = vrot.slane %v542, 1
      %v1297 = vsel %vm1266, %v1294, %v1296
      %v1298 = vrot.slane %v543, 1
      %v1299 = vsel %vm1266, %v1296, %v1298
      %v1300 = vrot.slane %v544, 1
      %v1301 = vsel %vm1266, %v1298, %v1300
      %v1302 = vrot.slane %v545, 1
      %v1303 = vsel %vm1266, %v1300, %v1302
      %v1304 = vrot.slane %v546, 1
      %v1305 = vsel %vm1266, %v1302, %v1304
      %v1306 = vrot.slane %v547, 1
      %v1307 = vsel %vm1266, %v1304, %v1306
      %v1308 = vrot.slane %v548, 1
      %v1309 = vsel %vm1266, %v1306, %v1308
      %v1310 = vrot.slane %v549, 1
      %v1311 = vsel %vm1266, %v1308, %v1310
      %v1312 = vrot.slane %v550, 1
      %v1313 = vsel %vm1266, %v1310, %v1312
      %v1314 = vrot.slane %v551, 1
      %v1315 = vsel %vm1266, %v1312, %v1314
      %v1316 = vrot.slane %v552, 1
      %v1317 = vsel %vm1266, %v1314, %v1316
      %v1318 = vrot.slane %v553, 1
      %v1319 = vsel %vm1266, %v1316, %v1318
      %v1320 = vrot.slane %v554, 1
      %v1321 = vsel %vm1266, %v1318, %v1320
      %v1322 = vrot.slane %v555, 1
      %v1323 = vsel %vm1266, %v1320, %v1322
      %v1324 = vrot.slane %v556, 1
      %v1325 = vsel %vm1266, %v1322, %v1324
      %v1326 = vrot.slane %v557, 1
      %v1327 = vsel %vm1266, %v1324, %v1326
      %v1328 = vrot.slane %v558, 1
      %v1329 = vsel %vm1266, %v1326, %v1328
      %v1363 = vsel %vm1266, %v1328, %v1267
      %v1364 = vsel %vm1008, 1, 0
      %v1365 = vsel %vm1009, 1, 0
      %v1366 = vsel %vm1010, 1, 0
      %v1367 = vsel %vm1011, 1, 0
      %v1368 = vsel %vm1012, 1, 0
      %v1369 = vsel %vm1013, 1, 0
      %v1370 = vsel %vm1014, 1, 0
      %v1371 = vsel %vm1015, 1, 0
      %v1372 = vsel %vm1016, 1, 0
      %v1373 = vsel %vm1017, 1, 0
      %v1374 = vsel %vm1018, 1, 0
      %v1375 = vsel %vm1019, 1, 0
      %v1376 = vsel %vm1020, 1, 0
      %v1377 = vsel %vm1021, 1, 0
      %v1378 = vsel %vm1022, 1, 0
      %v1379 = vsel %vm1023, 1, 0
      %v1380 = vsel %vm1024, 1, 0
      %v1381 = vsel %vm1025, 1, 0
      %v1382 = vsel %vm1026, 1, 0
      %v1383 = vsel %vm1027, 1, 0
      %v1384 = vsel %vm1028, 1, 0
      %v1385 = vsel %vm1029, 1, 0
      %v1386 = vsel %vm1030, 1, 0
      %v1387 = vsel %vm1031, 1, 0
      %v1388 = vsel %vm1032, 1, 0
      %v1389 = vsel %vm1033, 1, 0
      %v1390 = vsel %vm1034, 1, 0
      %v1391 = vsel %vm1035, 1, 0
      %v1392 = vsel %vm1036, 1, 0
      %v1393 = vsel %vm1037, 1, 0
      %v1394 = vsel %vm1038, 1, 0
      %v1395 = vsel %vm1039, 1, 0
      %vm1396 = vcmp.eq.s32.totalorder %v1364, 1
      %vm1397 = vcmp.eq.s32.totalorder %v1365, 1
      %vm1398 = vcmp.eq.s32.totalorder %v1366, 1
      %vm1399 = vcmp.eq.s32.totalorder %v1367, 1
      %vm1400 = vcmp.eq.s32.totalorder %v1368, 1
      %vm1401 = vcmp.eq.s32.totalorder %v1369, 1
      %vm1402 = vcmp.eq.s32.totalorder %v1370, 1
      %vm1403 = vcmp.eq.s32.totalorder %v1371, 1
      %vm1404 = vcmp.eq.s32.totalorder %v1372, 1
      %vm1405 = vcmp.eq.s32.totalorder %v1373, 1
      %vm1406 = vcmp.eq.s32.totalorder %v1374, 1
      %vm1407 = vcmp.eq.s32.totalorder %v1375, 1
      %vm1408 = vcmp.eq.s32.totalorder %v1376, 1
      %vm1409 = vcmp.eq.s32.totalorder %v1377, 1
      %vm1410 = vcmp.eq.s32.totalorder %v1378, 1
      %vm1411 = vcmp.eq.s32.totalorder %v1379, 1
      %vm1412 = vcmp.eq.s32.totalorder %v1380, 1
      %vm1413 = vcmp.eq.s32.totalorder %v1381, 1
      %vm1414 = vcmp.eq.s32.totalorder %v1382, 1
      %vm1415 = vcmp.eq.s32.totalorder %v1383, 1
      %vm1416 = vcmp.eq.s32.totalorder %v1384, 1
      %vm1417 = vcmp.eq.s32.totalorder %v1385, 1
      %vm1418 = vcmp.eq.s32.totalorder %v1386, 1
      %vm1419 = vcmp.eq.s32.totalorder %v1387, 1
      %vm1420 = vcmp.eq.s32.totalorder %v1388, 1
      %vm1421 = vcmp.eq.s32.totalorder %v1389, 1
      %vm1422 = vcmp.eq.s32.totalorder %v1390, 1
      %vm1423 = vcmp.eq.s32.totalorder %v1391, 1
      %vm1424 = vcmp.eq.s32.totalorder %v1392, 1
      %vm1425 = vcmp.eq.s32.totalorder %v1393, 1
      %vm1426 = vcmp.eq.s32.totalorder %v1394, 1
      %vm1427 = vcmp.eq.s32.totalorder %v1395, 1
      %v1428 = vsel %vm1396, %v1269, 0.0
      %v1429 = vsel %vm1397, %v1271, 0.0
      %v1430 = vsel %vm1398, %v1273, 0.0
      %v1431 = vsel %vm1399, %v1275, 0.0
      %v1432 = vsel %vm1400, %v1277, 0.0
      %v1433 = vsel %vm1401, %v1279, 0.0
      %v1434 = vsel %vm1402, %v1281, 0.0
      %v1435 = vsel %vm1403, %v1283, 0.0
      %v1436 = vsel %vm1404, %v1285, 0.0
      %v1437 = vsel %vm1405, %v1287, 0.0
      %v1438 = vsel %vm1406, %v1289, 0.0
      %v1439 = vsel %vm1407, %v1291, 0.0
      %v1440 = vsel %vm1408, %v1293, 0.0
      %v1441 = vsel %vm1409, %v1295, 0.0
      %v1442 = vsel %vm1410, %v1297, 0.0
      %v1443 = vsel %vm1411, %v1299, 0.0
      %v1444 = vsel %vm1412, %v1301, 0.0
      %v1445 = vsel %vm1413, %v1303, 0.0
      %v1446 = vsel %vm1414, %v1305, 0.0
      %v1447 = vsel %vm1415, %v1307, 0.0
      %v1448 = vsel %vm1416, %v1309, 0.0
      %v1449 = vsel %vm1417, %v1311, 0.0
      %v1450 = vsel %vm1418, %v1313, 0.0
      %v1451 = vsel %vm1419, %v1315, 0.0
      %v1452 = vsel %vm1420, %v1317, 0.0
      %v1453 = vsel %vm1421, %v1319, 0.0
      %v1454 = vsel %vm1422, %v1321, 0.0
      %v1455 = vsel %vm1423, %v1323, 0.0
      %v1456 = vsel %vm1424, %v1325, 0.0
      %v1457 = vsel %vm1425, %v1327, 0.0
      %v1458 = vsel %vm1426, %v1329, 0.0
      %v1459 = vsel %vm1427, %v1363, 0.0
      %1460 = vrot.lane.b32.xlu0 %v527, 4
      %v1461 = vpop.permute.xlu0 %1460
      %1462 = vrot.lane.b32.xlu0 %v528, 4
      %v1463 = vpop.permute.xlu0 %1462
      %1464 = vrot.lane.b32.xlu0 %v529, 4
      %v1465 = vpop.permute.xlu0 %1464
      %1466 = vrot.lane.b32.xlu0 %v530, 4
      %v1467 = vpop.permute.xlu0 %1466
      %1468 = vrot.lane.b32.xlu0 %v531, 4
      %v1469 = vpop.permute.xlu0 %1468
      %1470 = vrot.lane.b32.xlu0 %v532, 4
      %v1471 = vpop.permute.xlu0 %1470
      %1472 = vrot.lane.b32.xlu0 %v533, 4
      %v1473 = vpop.permute.xlu0 %1472
      %1474 = vrot.lane.b32.xlu0 %v534, 4
      %v1475 = vpop.permute.xlu0 %1474
      %1476 = vrot.lane.b32.xlu0 %v535, 4
      %v1477 = vpop.permute.xlu0 %1476
      %1478 = vrot.lane.b32.xlu0 %v536, 4
      %v1479 = vpop.permute.xlu0 %1478
      %1480 = vrot.lane.b32.xlu0 %v537, 4
      %v1481 = vpop.permute.xlu0 %1480
      %1482 = vrot.lane.b32.xlu0 %v538, 4
      %v1483 = vpop.permute.xlu0 %1482
      %1484 = vrot.lane.b32.xlu0 %v539, 4
      %v1485 = vpop.permute.xlu0 %1484
      %1486 = vrot.lane.b32.xlu0 %v540, 4
      %v1487 = vpop.permute.xlu0 %1486
      %1488 = vrot.lane.b32.xlu0 %v541, 4
      %v1489 = vpop.permute.xlu0 %1488
      %1490 = vrot.lane.b32.xlu0 %v542, 4
      %v1491 = vpop.permute.xlu0 %1490
      %1492 = vrot.lane.b32.xlu0 %v543, 4
      %v1493 = vpop.permute.xlu0 %1492
      %1494 = vrot.lane.b32.xlu0 %v544, 4
      %v1495 = vpop.permute.xlu0 %1494
      %1496 = vrot.lane.b32.xlu0 %v545, 4
      %v1497 = vpop.permute.xlu0 %1496
      %1498 = vrot.lane.b32.xlu0 %v546, 4
      %v1499 = vpop.permute.xlu0 %1498
      %1500 = vrot.lane.b32.xlu0 %v547, 4
      %v1501 = vpop.permute.xlu0 %1500
      %1502 = vrot.lane.b32.xlu0 %v548, 4
      %v1503 = vpop.permute.xlu0 %1502
      %1504 = vrot.lane.b32.xlu0 %v549, 4
      %v1505 = vpop.permute.xlu0 %1504
      %1506 = vrot.lane.b32.xlu0 %v550, 4
      %v1507 = vpop.permute.xlu0 %1506
      %1508 = vrot.lane.b32.xlu0 %v551, 4
      %v1509 = vpop.permute.xlu0 %1508
      %1510 = vrot.lane.b32.xlu0 %v552, 4
      %v1511 = vpop.permute.xlu0 %1510
      %1512 = vrot.lane.b32.xlu0 %v553, 4
      %v1513 = vpop.permute.xlu0 %1512
      %1514 = vrot.lane.b32.xlu0 %v554, 4
      %v1515 = vpop.permute.xlu0 %1514
      %1516 = vrot.lane.b32.xlu0 %v555, 4
      %v1517 = vpop.permute.xlu0 %1516
      %1518 = vrot.lane.b32.xlu0 %v556, 4
      %v1519 = vpop.permute.xlu0 %1518
      %1520 = vrot.lane.b32.xlu0 %v557, 4
      %v1521 = vpop.permute.xlu0 %1520
      %1522 = vrot.lane.b32.xlu0 %v558, 4
      %v1523 = vpop.permute.xlu0 %1522
      %1588 = vrot.lane.b32.xlu0 %v1428, 8
      %v1589 = vpop.permute.xlu0 %1588
      %1590 = vrot.lane.b32.xlu0 %v1429, 8
      %v1591 = vpop.permute.xlu0 %1590
      %1592 = vrot.lane.b32.xlu0 %v1430, 8
      %v1593 = vpop.permute.xlu0 %1592
      %1594 = vrot.lane.b32.xlu0 %v1431, 8
      %v1595 = vpop.permute.xlu0 %1594
      %1596 = vrot.lane.b32.xlu0 %v1432, 8
      %v1597 = vpop.permute.xlu0 %1596
      %1598 = vrot.lane.b32.xlu0 %v1433, 8
      %v1599 = vpop.permute.xlu0 %1598
      %1600 = vrot.lane.b32.xlu0 %v1434, 8
      %v1601 = vpop.permute.xlu0 %1600
      %1602 = vrot.lane.b32.xlu0 %v1435, 8
      %v1603 = vpop.permute.xlu0 %1602
      %1604 = vrot.lane.b32.xlu0 %v1436, 8
      %v1605 = vpop.permute.xlu0 %1604
      %1606 = vrot.lane.b32.xlu0 %v1437, 8
      %v1607 = vpop.permute.xlu0 %1606
      %1608 = vrot.lane.b32.xlu0 %v1438, 8
      %v1609 = vpop.permute.xlu0 %1608
      %1610 = vrot.lane.b32.xlu0 %v1439, 8
      %v1611 = vpop.permute.xlu0 %1610
      %1612 = vrot.lane.b32.xlu0 %v1440, 8
      %v1613 = vpop.permute.xlu0 %1612
      %1614 = vrot.lane.b32.xlu0 %v1441, 8
      %v1615 = vpop.permute.xlu0 %1614
      %1616 = vrot.lane.b32.xlu0 %v1442, 8
      %v1617 = vpop.permute.xlu0 %1616
      %1618 = vrot.lane.b32.xlu0 %v1443, 8
      %v1619 = vpop.permute.xlu0 %1618
      %1620 = vrot.lane.b32.xlu0 %v1444, 8
      %v1621 = vpop.permute.xlu0 %1620
      %1622 = vrot.lane.b32.xlu0 %v1445, 8
      %v1623 = vpop.permute.xlu0 %1622
      %1624 = vrot.lane.b32.xlu0 %v1446, 8
      %v1625 = vpop.permute.xlu0 %1624
      %1626 = vrot.lane.b32.xlu0 %v1447, 8
      %v1627 = vpop.permute.xlu0 %1626
      %1628 = vrot.lane.b32.xlu0 %v1448, 8
      %v1629 = vpop.permute.xlu0 %1628
      %1630 = vrot.lane.b32.xlu0 %v1449, 8
      %v1631 = vpop.permute.xlu0 %1630
      %1632 = vrot.lane.b32.xlu0 %v1450, 8
      %v1633 = vpop.permute.xlu0 %1632
      %1634 = vrot.lane.b32.xlu0 %v1451, 8
      %v1635 = vpop.permute.xlu0 %1634
      %1636 = vrot.lane.b32.xlu0 %v1452, 8
      %v1637 = vpop.permute.xlu0 %1636
      %1638 = vrot.lane.b32.xlu0 %v1453, 8
      %v1639 = vpop.permute.xlu0 %1638
      %1640 = vrot.lane.b32.xlu0 %v1454, 8
      %v1641 = vpop.permute.xlu0 %1640
      %1642 = vrot.lane.b32.xlu0 %v1455, 8
      %v1643 = vpop.permute.xlu0 %1642
      %1644 = vrot.lane.b32.xlu0 %v1456, 8
      %v1645 = vpop.permute.xlu0 %1644
      %1646 = vrot.lane.b32.xlu0 %v1457, 8
      %v1647 = vpop.permute.xlu0 %1646
      %1648 = vrot.lane.b32.xlu0 %v1458, 8
      %v1649 = vpop.permute.xlu0 %1648
      %1650 = vrot.lane.b32.xlu0 %v1459, 8
      %v1651 = vpop.permute.xlu0 %1650
      %vm1684 = vcmask 31744
      %v1685 = vsel %vm1684, %v1234, %v1461
      %v1686 = vsel %vm1684, %v1235, %v1463
      %v1687 = vsel %vm1684, %v1236, %v1465
      %v1688 = vsel %vm1684, %v1237, %v1467
      %v1689 = vsel %vm1684, %v1238, %v1469
      %v1690 = vsel %vm1684, %v1239, %v1471
      %v1691 = vsel %vm1684, %v1240, %v1473
      %v1692 = vsel %vm1684, %v1241, %v1475
      %v1693 = vsel %vm1684, %v1242, %v1477
      %v1694 = vsel %vm1684, %v1243, %v1479
      %v1695 = vsel %vm1684, %v1244, %v1481
      %v1696 = vsel %vm1684, %v1245, %v1483
      %v1697 = vsel %vm1684, %v1246, %v1485
      %v1698 = vsel %vm1684, %v1247, %v1487
      %v1699 = vsel %vm1684, %v1248, %v1489
      %v1700 = vsel %vm1684, %v1249, %v1491
      %v1701 = vsel %vm1684, %v1250, %v1493
      %v1702 = vsel %vm1684, %v1251, %v1495
      %v1703 = vsel %vm1684, %v1252, %v1497
      %v1704 = vsel %vm1684, %v1253, %v1499
      %v1705 = vsel %vm1684, %v1254, %v1501
      %v1706 = vsel %vm1684, %v1255, %v1503
      %v1707 = vsel %vm1684, %v1256, %v1505
      %v1708 = vsel %vm1684, %v1257, %v1507
      %v1709 = vsel %vm1684, %v1258, %v1509
      %v1710 = vsel %vm1684, %v1259, %v1511
      %v1711 = vsel %vm1684, %v1260, %v1513
      %v1712 = vsel %vm1684, %v1261, %v1515
      %v1713 = vsel %vm1684, %v1262, %v1517
      %v1714 = vsel %vm1684, %v1263, %v1519
      %v1715 = vsel %vm1684, %v1264, %v1521
      %v1716 = vsel %vm1684, %v1265, %v1523
      %vm1717 = vcmask 64512
      %v1718 = vsel %vm1717, %v1685, %v1589
      %v1719 = vsel %vm1717, %v1686, %v1591
      %v1720 = vsel %vm1717, %v1687, %v1593
      %v1721 = vsel %vm1717, %v1688, %v1595
      %v1722 = vsel %vm1717, %v1689, %v1597
      %v1723 = vsel %vm1717, %v1690, %v1599
      %v1724 = vsel %vm1717, %v1691, %v1601
      %v1725 = vsel %vm1717, %v1692, %v1603
      %v1726 = vsel %vm1717, %v1693, %v1605
      %v1727 = vsel %vm1717, %v1694, %v1607
      %v1728 = vsel %vm1717, %v1695, %v1609
      %v1729 = vsel %vm1717, %v1696, %v1611
      %v1730 = vsel %vm1717, %v1697, %v1613
      %v1731 = vsel %vm1717, %v1698, %v1615
      %v1732 = vsel %vm1717, %v1699, %v1617
      %v1733 = vsel %vm1717, %v1700, %v1619
      %v1734 = vsel %vm1717, %v1701, %v1621
      %v1735 = vsel %vm1717, %v1702, %v1623
      %v1736 = vsel %vm1717, %v1703, %v1625
      %v1737 = vsel %vm1717, %v1704, %v1627
      %v1738 = vsel %vm1717, %v1705, %v1629
      %v1739 = vsel %vm1717, %v1706, %v1631
      %v1740 = vsel %vm1717, %v1707, %v1633
      %v1741 = vsel %vm1717, %v1708, %v1635
      %v1742 = vsel %vm1717, %v1709, %v1637
      %v1743 = vsel %vm1717, %v1710, %v1639
      %v1744 = vsel %vm1717, %v1711, %v1641
      %v1745 = vsel %vm1717, %v1712, %v1643
      %v1746 = vsel %vm1717, %v1713, %v1645
      %v1747 = vsel %vm1717, %v1714, %v1647
      %v1748 = vsel %vm1717, %v1715, %v1649
      %v1749 = vsel %vm1717, %v1716, %v1651
      %s1750 = scalar_lea.vmem %s3, 16
      %v1751 = vld [vmem:[%s1750] sm:$0xff]
      %v1752 = vld [vmem:[%s1750 + $0x8] sm:$0xf]
      %vm1753 = vcmask 97280
      %v1755 = vsel %vm1753, %v1718, 0
      %v1758 = vsel %vm1753, %v1719, 0
      %v1761 = vsel %vm1753, %v1720, 0
      %v1764 = vsel %vm1753, %v1721, 0
      %v1767 = vsel %vm1753, %v1722, 0
      %v1770 = vsel %vm1753, %v1723, 0
      %v1773 = vsel %vm1753, %v1724, 0
      %v1776 = vsel %vm1753, %v1725, 0
      %v1779 = vsel %vm1753, %v1726, 0
      %v1782 = vsel %vm1753, %v1727, 0
      %v1785 = vsel %vm1753, %v1728, 0
      %v1788 = vsel %vm1753, %v1729, 0
      %v1791 = vsel %vm1753, %v1730, 0
      %v1794 = vsel %vm1753, %v1731, 0
      %v1797 = vsel %vm1753, %v1732, 0
      %v1800 = vsel %vm1753, %v1733, 0
      %v1803 = vsel %vm1753, %v1734, 0
      %v1806 = vsel %vm1753, %v1735, 0
      %v1809 = vsel %vm1753, %v1736, 0
      %v1812 = vsel %vm1753, %v1737, 0
      %v1815 = vsel %vm1753, %v1738, 0
      %v1818 = vsel %vm1753, %v1739, 0
      %v1821 = vsel %vm1753, %v1740, 0
      %v1824 = vsel %vm1753, %v1741, 0
      %v1827 = vsel %vm1753, %v1742, 0
      %v1830 = vsel %vm1753, %v1743, 0
      %v1833 = vsel %vm1753, %v1744, 0
      %v1836 = vsel %vm1753, %v1745, 0
      %v1839 = vsel %vm1753, %v1746, 0
      %v1842 = vsel %vm1753, %v1747, 0
      %v1845 = vsel %vm1753, %v1748, 0
      %v1848 = vsel %vm1753, %v1749, 0
      %vm1850 = vcmask 1043456
      %v1852 = vsel %vm1850, %v1752, 0
      %1854 = vmatpush.msra.mxu0 0.0
      %1855 = vmatpush.msra.mxu0 0.0
      %1856 = vmatpush.msra.mxu0 0.0
      %1857 = vmatpush.msra.mxu0 0.0
      %1858 = vmatpush.msra.mxu0 0.0
      %1859 = vmatpush.msra.mxu0 0.0
      %1860 = vmatpush.msra.mxu0 0.0
      %1861 = vmatpush.msra.mxu0 0.0
      %1862 = vmatpush.msra.mxu0 0.0
      %1863 = vmatpush.msra.mxu0 0.0
      %1864 = vmatpush.msra.mxu0 0.0
      %1865 = vmatpush.msra.mxu0 0.0
      %1866 = vmatpush.msra.mxu0 0.0
      %1867 = vmatpush.msra.mxu0 0.0
      %1868 = vmatpush.msra.mxu0 %v1852
      %1869 = vmatpush.msra.mxu0 %v1751
      %1870 = vmatmul.f32.gmra.mxu0 %v1755
      %v1871 = vpop.f32.mrf.mxu0
      %v1872 = vadd.f32 0.0, %v1871
      %1873 = vmatmul.f32.gmra.mxu0 %v1758
      %v1874 = vpop.f32.mrf.mxu0
      %v1875 = vadd.f32 0.0, %v1874
      %1876 = vmatmul.f32.gmra.mxu0 %v1761
      %v1877 = vpop.f32.mrf.mxu0
      %v1878 = vadd.f32 0.0, %v1877
      %1879 = vmatmul.f32.gmra.mxu0 %v1764
      %v1880 = vpop.f32.mrf.mxu0
      %v1881 = vadd.f32 0.0, %v1880
      %1882 = vmatmul.f32.gmra.mxu0 %v1767
      %v1883 = vpop.f32.mrf.mxu0
      %v1884 = vadd.f32 0.0, %v1883
      %1885 = vmatmul.f32.gmra.mxu0 %v1770
      %v1886 = vpop.f32.mrf.mxu0
      %v1887 = vadd.f32 0.0, %v1886
      %1888 = vmatmul.f32.gmra.mxu0 %v1773
      %v1889 = vpop.f32.mrf.mxu0
      %v1890 = vadd.f32 0.0, %v1889
      %1891 = vmatmul.f32.gmra.mxu0 %v1776
      %v1892 = vpop.f32.mrf.mxu0
      %v1893 = vadd.f32 0.0, %v1892
      %1894 = vmatmul.f32.gmra.mxu0 %v1779
      %v1895 = vpop.f32.mrf.mxu0
      %v1896 = vadd.f32 0.0, %v1895
      %1897 = vmatmul.f32.gmra.mxu0 %v1782
      %v1898 = vpop.f32.mrf.mxu0
      %v1899 = vadd.f32 0.0, %v1898
      %1900 = vmatmul.f32.gmra.mxu0 %v1785
      %v1901 = vpop.f32.mrf.mxu0
      %v1902 = vadd.f32 0.0, %v1901
      %1903 = vmatmul.f32.gmra.mxu0 %v1788
      %v1904 = vpop.f32.mrf.mxu0
      %v1905 = vadd.f32 0.0, %v1904
      %1906 = vmatmul.f32.gmra.mxu0 %v1791
      %v1907 = vpop.f32.mrf.mxu0
      %v1908 = vadd.f32 0.0, %v1907
      %1909 = vmatmul.f32.gmra.mxu0 %v1794
      %v1910 = vpop.f32.mrf.mxu0
      %v1911 = vadd.f32 0.0, %v1910
      %1912 = vmatmul.f32.gmra.mxu0 %v1797
      %v1913 = vpop.f32.mrf.mxu0
      %v1914 = vadd.f32 0.0, %v1913
      %1915 = vmatmul.f32.gmra.mxu0 %v1800
      %v1916 = vpop.f32.mrf.mxu0
      %v1917 = vadd.f32 0.0, %v1916
      %1918 = vmatmul.f32.gmra.mxu0 %v1803
      %v1919 = vpop.f32.mrf.mxu0
      %v1920 = vadd.f32 0.0, %v1919
      %1921 = vmatmul.f32.gmra.mxu0 %v1806
      %v1922 = vpop.f32.mrf.mxu0
      %v1923 = vadd.f32 0.0, %v1922
      %1924 = vmatmul.f32.gmra.mxu0 %v1809
      %v1925 = vpop.f32.mrf.mxu0
      %v1926 = vadd.f32 0.0, %v1925
      %1927 = vmatmul.f32.gmra.mxu0 %v1812
      %v1928 = vpop.f32.mrf.mxu0
      %v1929 = vadd.f32 0.0, %v1928
      %1930 = vmatmul.f32.gmra.mxu0 %v1815
      %v1931 = vpop.f32.mrf.mxu0
      %v1932 = vadd.f32 0.0, %v1931
      %1933 = vmatmul.f32.gmra.mxu0 %v1818
      %v1934 = vpop.f32.mrf.mxu0
      %v1935 = vadd.f32 0.0, %v1934
      %1936 = vmatmul.f32.gmra.mxu0 %v1821
      %v1937 = vpop.f32.mrf.mxu0
      %v1938 = vadd.f32 0.0, %v1937
      %1939 = vmatmul.f32.gmra.mxu0 %v1824
      %v1940 = vpop.f32.mrf.mxu0
      %v1941 = vadd.f32 0.0, %v1940
      %1942 = vmatmul.f32.gmra.mxu0 %v1827
      %v1943 = vpop.f32.mrf.mxu0
      %v1944 = vadd.f32 0.0, %v1943
      %1945 = vmatmul.f32.gmra.mxu0 %v1830
      %v1946 = vpop.f32.mrf.mxu0
      %v1947 = vadd.f32 0.0, %v1946
      %1948 = vmatmul.f32.gmra.mxu0 %v1833
      %v1949 = vpop.f32.mrf.mxu0
      %v1950 = vadd.f32 0.0, %v1949
      %1951 = vmatmul.f32.gmra.mxu0 %v1836
      %v1952 = vpop.f32.mrf.mxu0
      %v1953 = vadd.f32 0.0, %v1952
      %1954 = vmatmul.f32.gmra.mxu0 %v1839
      %v1955 = vpop.f32.mrf.mxu0
      %v1956 = vadd.f32 0.0, %v1955
      %1957 = vmatmul.f32.gmra.mxu0 %v1842
      %v1958 = vpop.f32.mrf.mxu0
      %v1959 = vadd.f32 0.0, %v1958
      %1960 = vmatmul.f32.gmra.mxu0 %v1845
      %v1961 = vpop.f32.mrf.mxu0
      %v1962 = vadd.f32 0.0, %v1961
      %1963 = vmatmul.f32.gmra.mxu0 %v1848
      %v1964 = vpop.f32.mrf.mxu0
      %v1965 = vadd.f32 0.0, %v1964
      %1966 = vdwg.mxu0
      %1967 = vst.msk [vmem:[#allocation2] sm:$0xff] %vm1684, %v1872
      %1968 = vst.msk [vmem:[#allocation2 + $0x8] sm:$0xff] %vm1684, %v1875
      %1969 = vst.msk [vmem:[#allocation2 + $0x10] sm:$0xff] %vm1684, %v1878
      %1970 = vst.msk [vmem:[#allocation2 + $0x18] sm:$0xff] %vm1684, %v1881
      %1971 = vst.msk [vmem:[#allocation2 + $0x20] sm:$0xff] %vm1684, %v1884
      %1972 = vst.msk [vmem:[#allocation2 + $0x28] sm:$0xff] %vm1684, %v1887
      %1973 = vst.msk [vmem:[#allocation2 + $0x30] sm:$0xff] %vm1684, %v1890
      %1974 = vst.msk [vmem:[#allocation2 + $0x38] sm:$0xff] %vm1684, %v1893
      %1975 = vst.msk [vmem:[#allocation2 + $0x40] sm:$0xff] %vm1684, %v1896
      %1976 = vst.msk [vmem:[#allocation2 + $0x48] sm:$0xff] %vm1684, %v1899
      %1977 = vst.msk [vmem:[#allocation2 + $0x50] sm:$0xff] %vm1684, %v1902
      %1978 = vst.msk [vmem:[#allocation2 + $0x58] sm:$0xff] %vm1684, %v1905
      %1979 = vst.msk [vmem:[#allocation2 + $0x60] sm:$0xff] %vm1684, %v1908
      %1980 = vst.msk [vmem:[#allocation2 + $0x68] sm:$0xff] %vm1684, %v1911
      %1981 = vst.msk [vmem:[#allocation2 + $0x70] sm:$0xff] %vm1684, %v1914
      %1982 = vst.msk [vmem:[#allocation2 + $0x78] sm:$0xff] %vm1684, %v1917
      %1983 = vst.msk [vmem:[#allocation2 + $0x80] sm:$0xff] %vm1684, %v1920
      %1984 = vst.msk [vmem:[#allocation2 + $0x88] sm:$0xff] %vm1684, %v1923
      %1985 = vst.msk [vmem:[#allocation2 + $0x90] sm:$0xff] %vm1684, %v1926
      %1986 = vst.msk [vmem:[#allocation2 + $0x98] sm:$0xff] %vm1684, %v1929
      %1987 = vst.msk [vmem:[#allocation2 + $0xa0] sm:$0xff] %vm1684, %v1932
      %1988 = vst.msk [vmem:[#allocation2 + $0xa8] sm:$0xff] %vm1684, %v1935
      %1989 = vst.msk [vmem:[#allocation2 + $0xb0] sm:$0xff] %vm1684, %v1938
      %1990 = vst.msk [vmem:[#allocation2 + $0xb8] sm:$0xff] %vm1684, %v1941
      %1991 = vst.msk [vmem:[#allocation2 + $0xc0] sm:$0xff] %vm1684, %v1944
      %1992 = vst.msk [vmem:[#allocation2 + $0xc8] sm:$0xff] %vm1684, %v1947
      %1993 = vst.msk [vmem:[#allocation2 + $0xd0] sm:$0xff] %vm1684, %v1950
      %1994 = vst.msk [vmem:[#allocation2 + $0xd8] sm:$0xff] %vm1684, %v1953
      %1995 = vst.msk [vmem:[#allocation2 + $0xe0] sm:$0xff] %vm1684, %v1956
      %1996 = vst.msk [vmem:[#allocation2 + $0xe8] sm:$0xff] %vm1684, %v1959
      %1997 = vst.msk [vmem:[#allocation2 + $0xf0] sm:$0xff] %vm1684, %v1962
      %1998 = vst.msk [vmem:[#allocation2 + $0xf8] sm:$0xff] %vm1684, %v1965
      %s1999 = scalar_lea.vmem %s3, 32
      %v2000 = vld [vmem:[%s1999] sm:$0xff]
      %v2001 = vld [vmem:[%s1999 + $0x8] sm:$0xf]
      %v2003 = vsel %vm1850, %v2001, 0
      %2005 = vmatpush.msra.mxu0 0.0
      %2006 = vmatpush.msra.mxu0 0.0
      %2007 = vmatpush.msra.mxu0 0.0
      %2008 = vmatpush.msra.mxu0 0.0
      %2009 = vmatpush.msra.mxu0 0.0
      %2010 = vmatpush.msra.mxu0 0.0
      %2011 = vmatpush.msra.mxu0 0.0
      %2012 = vmatpush.msra.mxu0 0.0
      %2013 = vmatpush.msra.mxu0 0.0
      %2014 = vmatpush.msra.mxu0 0.0
      %2015 = vmatpush.msra.mxu0 0.0
      %2016 = vmatpush.msra.mxu0 0.0
      %2017 = vmatpush.msra.mxu0 0.0
      %2018 = vmatpush.msra.mxu0 0.0
      %2019 = vmatpush.msra.mxu0 %v2003
      %2020 = vmatpush.msra.mxu0 %v2000
      %2021 = vmatmul.f32.gmra.mxu0 %v1755
      %v2022 = vpop.f32.mrf.mxu0
      %2023 = vmatmul.f32.gmra.mxu0 %v1758
      %v2024 = vpop.f32.mrf.mxu0
      %2025 = vmatmul.f32.gmra.mxu0 %v1761
      %v2026 = vpop.f32.mrf.mxu0
      %v2027 = vadd.f32 0.0, %v2026
      %2028 = vmatmul.f32.gmra.mxu0 %v1764
      %v2029 = vpop.f32.mrf.mxu0
      %v2030 = vadd.f32 0.0, %v2029
      %2031 = vmatmul.f32.gmra.mxu0 %v1767
      %v2032 = vpop.f32.mrf.mxu0
      %v2033 = vadd.f32 0.0, %v2032
      %2034 = vmatmul.f32.gmra.mxu0 %v1770
      %v2035 = vpop.f32.mrf.mxu0
      %v2036 = vadd.f32 0.0, %v2035
      %2037 = vmatmul.f32.gmra.mxu0 %v1773
      %v2038 = vpop.f32.mrf.mxu0
      %v2039 = vadd.f32 0.0, %v2038
      %2040 = vmatmul.f32.gmra.mxu0 %v1776
      %v2041 = vpop.f32.mrf.mxu0
      %v2042 = vadd.f32 0.0, %v2041
      %2043 = vmatmul.f32.gmra.mxu0 %v1779
      %v2044 = vpop.f32.mrf.mxu0
      %v2045 = vadd.f32 0.0, %v2044
      %2046 = vmatmul.f32.gmra.mxu0 %v1782
      %v2047 = vpop.f32.mrf.mxu0
      %v2048 = vadd.f32 0.0, %v2047
      %2049 = vmatmul.f32.gmra.mxu0 %v1785
      %v2050 = vpop.f32.mrf.mxu0
      %v2051 = vadd.f32 0.0, %v2050
      %2052 = vmatmul.f32.gmra.mxu0 %v1788
      %v2053 = vpop.f32.mrf.mxu0
      %v2054 = vadd.f32 0.0, %v2053
      %2055 = vmatmul.f32.gmra.mxu0 %v1791
      %v2056 = vpop.f32.mrf.mxu0
      %v2057 = vadd.f32 0.0, %v2056
      %2058 = vmatmul.f32.gmra.mxu0 %v1794
      %v2059 = vpop.f32.mrf.mxu0
      %v2060 = vadd.f32 0.0, %v2059
      %2061 = vmatmul.f32.gmra.mxu0 %v1797
      %v2062 = vpop.f32.mrf.mxu0
      %v2063 = vadd.f32 0.0, %v2062
      %2064 = vmatmul.f32.gmra.mxu0 %v1800
      %v2065 = vpop.f32.mrf.mxu0
      %v2066 = vadd.f32 0.0, %v2065
      %2067 = vmatmul.f32.gmra.mxu0 %v1803
      %v2068 = vpop.f32.mrf.mxu0
      %v2069 = vadd.f32 0.0, %v2068
      %2070 = vmatmul.f32.gmra.mxu0 %v1806
      %v2071 = vpop.f32.mrf.mxu0
      %v2072 = vadd.f32 0.0, %v2071
      %2073 = vmatmul.f32.gmra.mxu0 %v1809
      %v2074 = vpop.f32.mrf.mxu0
      %v2075 = vadd.f32 0.0, %v2074
      %2076 = vmatmul.f32.gmra.mxu0 %v1812
      %v2077 = vpop.f32.mrf.mxu0
      %v2078 = vadd.f32 0.0, %v2077
      %2079 = vmatmul.f32.gmra.mxu0 %v1815
      %v2080 = vpop.f32.mrf.mxu0
      %v2081 = vadd.f32 0.0, %v2080
      %2082 = vmatmul.f32.gmra.mxu0 %v1818
      %v2083 = vpop.f32.mrf.mxu0
      %v2084 = vadd.f32 0.0, %v2083
      %2085 = vmatmul.f32.gmra.mxu0 %v1821
      %v2086 = vpop.f32.mrf.mxu0
      %v2087 = vadd.f32 0.0, %v2086
      %2088 = vmatmul.f32.gmra.mxu0 %v1824
      %v2089 = vpop.f32.mrf.mxu0
      %v2090 = vadd.f32 0.0, %v2089
      %2091 = vmatmul.f32.gmra.mxu0 %v1827
      %v2092 = vpop.f32.mrf.mxu0
      %v2093 = vadd.f32 0.0, %v2092
      %2094 = vmatmul.f32.gmra.mxu0 %v1830
      %v2095 = vpop.f32.mrf.mxu0
      %v2096 = vadd.f32 0.0, %v2095
      %2097 = vmatmul.f32.gmra.mxu0 %v1833
      %v2098 = vpop.f32.mrf.mxu0
      %v2099 = vadd.f32 0.0, %v2098
      %2100 = vmatmul.f32.gmra.mxu0 %v1836
      %v2101 = vpop.f32.mrf.mxu0
      %v2102 = vadd.f32 0.0, %v2101
      %2103 = vmatmul.f32.gmra.mxu0 %v1839
      %v2104 = vpop.f32.mrf.mxu0
      %v2105 = vadd.f32 0.0, %v2104
      %2106 = vmatmul.f32.gmra.mxu0 %v1842
      %v2107 = vpop.f32.mrf.mxu0
      %v2108 = vadd.f32 0.0, %v2107
      %2109 = vmatmul.f32.gmra.mxu0 %v1845
      %v2110 = vpop.f32.mrf.mxu0
      %v2111 = vadd.f32 0.0, %v2110
      %2112 = vmatmul.f32.gmra.mxu0 %v1848
      %v2113 = vpop.f32.mrf.mxu0
      %v2114 = vadd.f32 0.0, %v2113
      %2115 = vdwg.mxu0
      %v2116 = vld [vmem:[#allocation2] sm:$0xff]
      %v2117 = vld [vmem:[#allocation2 + $0x8] sm:$0xff]
      %v2118 = vld [vmem:[#allocation2 + $0x10] sm:$0xff]
      %v2119 = vld [vmem:[#allocation2 + $0x18] sm:$0xff]
      %v2120 = vld [vmem:[#allocation2 + $0x20] sm:$0xff]
      %v2121 = vld [vmem:[#allocation2 + $0x28] sm:$0xff]
      %v2122 = vld [vmem:[#allocation2 + $0x30] sm:$0xff]
      %v2123 = vld [vmem:[#allocation2 + $0x38] sm:$0xff]
      %v2124 = vld [vmem:[#allocation2 + $0x40] sm:$0xff]
      %v2125 = vld [vmem:[#allocation2 + $0x48] sm:$0xff]
      %v2126 = vld [vmem:[#allocation2 + $0x50] sm:$0xff]
      %v2127 = vld [vmem:[#allocation2 + $0x58] sm:$0xff]
      %v2128 = vld [vmem:[#allocation2 + $0x60] sm:$0xff]
      %v2129 = vld [vmem:[#allocation2 + $0x68] sm:$0xff]
      %v2130 = vld [vmem:[#allocation2 + $0x70] sm:$0xff]
      %v2131 = vld [vmem:[#allocation2 + $0x78] sm:$0xff]
      %v2132 = vld [vmem:[#allocation2 + $0x80] sm:$0xff]
      %v2133 = vld [vmem:[#allocation2 + $0x88] sm:$0xff]
      %v2134 = vld [vmem:[#allocation2 + $0x90] sm:$0xff]
      %v2135 = vld [vmem:[#allocation2 + $0x98] sm:$0xff]
      %v2136 = vld [vmem:[#allocation2 + $0xa0] sm:$0xff]
      %v2137 = vld [vmem:[#allocation2 + $0xa8] sm:$0xff]
      %v2138 = vld [vmem:[#allocation2 + $0xb0] sm:$0xff]
      %v2139 = vld [vmem:[#allocation2 + $0xb8] sm:$0xff]
      %v2140 = vld [vmem:[#allocation2 + $0xc0] sm:$0xff]
      %v2141 = vld [vmem:[#allocation2 + $0xc8] sm:$0xff]
      %v2142 = vld [vmem:[#allocation2 + $0xd0] sm:$0xff]
      %v2143 = vld [vmem:[#allocation2 + $0xd8] sm:$0xff]
      %v2144 = vld [vmem:[#allocation2 + $0xe0] sm:$0xff]
      %v2145 = vld [vmem:[#allocation2 + $0xe8] sm:$0xff]
      %v2146 = vadd.f32 %v2116, %v2027
      %v2147 = vadd.f32 %v2117, %v2030
      %v2148 = vadd.f32 %v2118, %v2033
      %v2149 = vadd.f32 %v2119, %v2036
      %v2150 = vadd.f32 %v2120, %v2039
      %v2151 = vadd.f32 %v2121, %v2042
      %v2152 = vadd.f32 %v2122, %v2045
      %v2153 = vadd.f32 %v2123, %v2048
      %v2154 = vadd.f32 %v2124, %v2051
      %v2155 = vadd.f32 %v2125, %v2054
      %v2156 = vadd.f32 %v2126, %v2057
      %v2157 = vadd.f32 %v2127, %v2060
      %v2158 = vadd.f32 %v2128, %v2063
      %v2159 = vadd.f32 %v2129, %v2066
      %v2160 = vadd.f32 %v2130, %v2069
      %v2161 = vadd.f32 %v2131, %v2072
      %v2162 = vadd.f32 %v2132, %v2075
      %v2163 = vadd.f32 %v2133, %v2078
      %v2164 = vadd.f32 %v2134, %v2081
      %v2165 = vadd.f32 %v2135, %v2084
      %v2166 = vadd.f32 %v2136, %v2087
      %v2167 = vadd.f32 %v2137, %v2090
      %v2168 = vadd.f32 %v2138, %v2093
      %v2169 = vadd.f32 %v2139, %v2096
      %v2170 = vadd.f32 %v2140, %v2099
      %v2171 = vadd.f32 %v2141, %v2102
      %v2172 = vadd.f32 %v2142, %v2105
      %v2173 = vadd.f32 %v2143, %v2108
      %v2174 = vadd.f32 %v2144, %v2111
      %v2175 = vadd.f32 %v2145, %v2114
      %2176 = vst.msk [vmem:[#allocation2] sm:$0xff] %vm1684, %v2146
      %2177 = vst.msk [vmem:[#allocation2 + $0x8] sm:$0xff] %vm1684, %v2147
      %2178 = vst.msk [vmem:[#allocation2 + $0x10] sm:$0xff] %vm1684, %v2148
      %2179 = vst.msk [vmem:[#allocation2 + $0x18] sm:$0xff] %vm1684, %v2149
      %2180 = vst.msk [vmem:[#allocation2 + $0x20] sm:$0xff] %vm1684, %v2150
      %2181 = vst.msk [vmem:[#allocation2 + $0x28] sm:$0xff] %vm1684, %v2151
      %2182 = vst.msk [vmem:[#allocation2 + $0x30] sm:$0xff] %vm1684, %v2152
      %2183 = vst.msk [vmem:[#allocation2 + $0x38] sm:$0xff] %vm1684, %v2153
      %2184 = vst.msk [vmem:[#allocation2 + $0x40] sm:$0xff] %vm1684, %v2154
      %2185 = vst.msk [vmem:[#allocation2 + $0x48] sm:$0xff] %vm1684, %v2155
      %2186 = vst.msk [vmem:[#allocation2 + $0x50] sm:$0xff] %vm1684, %v2156
      %2187 = vst.msk [vmem:[#allocation2 + $0x58] sm:$0xff] %vm1684, %v2157
      %2188 = vst.msk [vmem:[#allocation2 + $0x60] sm:$0xff] %vm1684, %v2158
      %2189 = vst.msk [vmem:[#allocation2 + $0x68] sm:$0xff] %vm1684, %v2159
      %2190 = vst.msk [vmem:[#allocation2 + $0x70] sm:$0xff] %vm1684, %v2160
      %2191 = vst.msk [vmem:[#allocation2 + $0x78] sm:$0xff] %vm1684, %v2161
      %2192 = vst.msk [vmem:[#allocation2 + $0x80] sm:$0xff] %vm1684, %v2162
      %2193 = vst.msk [vmem:[#allocation2 + $0x88] sm:$0xff] %vm1684, %v2163
      %2194 = vst.msk [vmem:[#allocation2 + $0x90] sm:$0xff] %vm1684, %v2164
      %2195 = vst.msk [vmem:[#allocation2 + $0x98] sm:$0xff] %vm1684, %v2165
      %2196 = vst.msk [vmem:[#allocation2 + $0xa0] sm:$0xff] %vm1684, %v2166
      %2197 = vst.msk [vmem:[#allocation2 + $0xa8] sm:$0xff] %vm1684, %v2167
      %2198 = vst.msk [vmem:[#allocation2 + $0xb0] sm:$0xff] %vm1684, %v2168
      %2199 = vst.msk [vmem:[#allocation2 + $0xb8] sm:$0xff] %vm1684, %v2169
      %2200 = vst.msk [vmem:[#allocation2 + $0xc0] sm:$0xff] %vm1684, %v2170
      %2201 = vst.msk [vmem:[#allocation2 + $0xc8] sm:$0xff] %vm1684, %v2171
      %2202 = vst.msk [vmem:[#allocation2 + $0xd0] sm:$0xff] %vm1684, %v2172
      %2203 = vst.msk [vmem:[#allocation2 + $0xd8] sm:$0xff] %vm1684, %v2173
      %2204 = vst.msk [vmem:[#allocation2 + $0xe0] sm:$0xff] %vm1684, %v2174
      %2205 = vst.msk [vmem:[#allocation2 + $0xe8] sm:$0xff] %vm1684, %v2175
      %v2206 = vld [vmem:[%s3] sm:$0xff]
      %v2207 = vld [vmem:[%s3 + $0x8] sm:$0xf]
      %v2209 = vsel %vm1850, %v2207, 0
      %2211 = vmatpush.msra.mxu0 0.0
      %2212 = vmatpush.msra.mxu0 0.0
      %2213 = vmatpush.msra.mxu0 0.0
      %2214 = vmatpush.msra.mxu0 0.0
      %2215 = vmatpush.msra.mxu0 0.0
      %2216 = vmatpush.msra.mxu0 0.0
      %2217 = vmatpush.msra.mxu0 0.0
      %2218 = vmatpush.msra.mxu0 0.0
      %2219 = vmatpush.msra.mxu0 0.0
      %2220 = vmatpush.msra.mxu0 0.0
      %2221 = vmatpush.msra.mxu0 0.0
      %2222 = vmatpush.msra.mxu0 0.0
      %2223 = vmatpush.msra.mxu0 0.0
      %2224 = vmatpush.msra.mxu0 0.0
      %2225 = vmatpush.msra.mxu0 %v2209
      %2226 = vmatpush.msra.mxu0 %v2206
      %2227 = vmatmul.f32.gmra.mxu0 %v1755
      %v2228 = vpop.f32.mrf.mxu0
      %v2229 = vadd.f32 0.0, %v2228
      %2230 = vmatmul.f32.gmra.mxu0 %v1758
      %v2231 = vpop.f32.mrf.mxu0
      %v2232 = vadd.f32 0.0, %v2231
      %2233 = vmatmul.f32.gmra.mxu0 %v1761
      %v2234 = vpop.f32.mrf.mxu0
      %v2235 = vadd.f32 0.0, %v2234
      %2236 = vmatmul.f32.gmra.mxu0 %v1764
      %v2237 = vpop.f32.mrf.mxu0
      %v2238 = vadd.f32 0.0, %v2237
      %2239 = vmatmul.f32.gmra.mxu0 %v1767
      %v2240 = vpop.f32.mrf.mxu0
      %v2241 = vadd.f32 0.0, %v2240
      %2242 = vmatmul.f32.gmra.mxu0 %v1770
      %v2243 = vpop.f32.mrf.mxu0
      %v2244 = vadd.f32 0.0, %v2243
      %2245 = vmatmul.f32.gmra.mxu0 %v1773
      %v2246 = vpop.f32.mrf.mxu0
      %v2247 = vadd.f32 0.0, %v2246
      %2248 = vmatmul.f32.gmra.mxu0 %v1776
      %v2249 = vpop.f32.mrf.mxu0
      %v2250 = vadd.f32 0.0, %v2249
      %2251 = vmatmul.f32.gmra.mxu0 %v1779
      %v2252 = vpop.f32.mrf.mxu0
      %v2253 = vadd.f32 0.0, %v2252
      %2254 = vmatmul.f32.gmra.mxu0 %v1782
      %v2255 = vpop.f32.mrf.mxu0
      %v2256 = vadd.f32 0.0, %v2255
      %2257 = vmatmul.f32.gmra.mxu0 %v1785
      %v2258 = vpop.f32.mrf.mxu0
      %v2259 = vadd.f32 0.0, %v2258
      %2260 = vmatmul.f32.gmra.mxu0 %v1788
      %v2261 = vpop.f32.mrf.mxu0
      %v2262 = vadd.f32 0.0, %v2261
      %2263 = vmatmul.f32.gmra.mxu0 %v1791
      %v2264 = vpop.f32.mrf.mxu0
      %v2265 = vadd.f32 0.0, %v2264
      %2266 = vmatmul.f32.gmra.mxu0 %v1794
      %v2267 = vpop.f32.mrf.mxu0
      %v2268 = vadd.f32 0.0, %v2267
      %2269 = vmatmul.f32.gmra.mxu0 %v1797
      %v2270 = vpop.f32.mrf.mxu0
      %v2271 = vadd.f32 0.0, %v2270
      %2272 = vmatmul.f32.gmra.mxu0 %v1800
      %v2273 = vpop.f32.mrf.mxu0
      %v2274 = vadd.f32 0.0, %v2273
      %2275 = vmatmul.f32.gmra.mxu0 %v1803
      %v2276 = vpop.f32.mrf.mxu0
      %v2277 = vadd.f32 0.0, %v2276
      %2278 = vmatmul.f32.gmra.mxu0 %v1806
      %v2279 = vpop.f32.mrf.mxu0
      %v2280 = vadd.f32 0.0, %v2279
      %2281 = vmatmul.f32.gmra.mxu0 %v1809
      %v2282 = vpop.f32.mrf.mxu0
      %v2283 = vadd.f32 0.0, %v2282
      %2284 = vmatmul.f32.gmra.mxu0 %v1812
      %v2285 = vpop.f32.mrf.mxu0
      %v2286 = vadd.f32 0.0, %v2285
      %2287 = vmatmul.f32.gmra.mxu0 %v1815
      %v2288 = vpop.f32.mrf.mxu0
      %v2289 = vadd.f32 0.0, %v2288
      %2290 = vmatmul.f32.gmra.mxu0 %v1818
      %v2291 = vpop.f32.mrf.mxu0
      %v2292 = vadd.f32 0.0, %v2291
      %2293 = vmatmul.f32.gmra.mxu0 %v1821
      %v2294 = vpop.f32.mrf.mxu0
      %v2295 = vadd.f32 0.0, %v2294
      %2296 = vmatmul.f32.gmra.mxu0 %v1824
      %v2297 = vpop.f32.mrf.mxu0
      %v2298 = vadd.f32 0.0, %v2297
      %2299 = vmatmul.f32.gmra.mxu0 %v1827
      %v2300 = vpop.f32.mrf.mxu0
      %v2301 = vadd.f32 0.0, %v2300
      %2302 = vmatmul.f32.gmra.mxu0 %v1830
      %v2303 = vpop.f32.mrf.mxu0
      %v2304 = vadd.f32 0.0, %v2303
      %2305 = vmatmul.f32.gmra.mxu0 %v1833
      %v2306 = vpop.f32.mrf.mxu0
      %v2307 = vadd.f32 0.0, %v2306
      %2308 = vmatmul.f32.gmra.mxu0 %v1836
      %v2309 = vpop.f32.mrf.mxu0
      %v2310 = vadd.f32 0.0, %v2309
      %2311 = vmatmul.f32.gmra.mxu0 %v1839
      %v2312 = vpop.f32.mrf.mxu0
      %v2313 = vadd.f32 0.0, %v2312
      %2314 = vmatmul.f32.gmra.mxu0 %v1842
      %v2315 = vpop.f32.mrf.mxu0
      %v2316 = vadd.f32 0.0, %v2315
      %2317 = vmatmul.f32.gmra.mxu0 %v1845
      %v2318 = vpop.f32.mrf.mxu0
      %2319 = vmatmul.f32.gmra.mxu0 %v1848
      %v2320 = vpop.f32.mrf.mxu0
      %2321 = vdwg.mxu0
      %v2322 = vld [vmem:[#allocation2 + $0x10] sm:$0xff]
      %v2323 = vld [vmem:[#allocation2 + $0x18] sm:$0xff]
      %v2324 = vld [vmem:[#allocation2 + $0x20] sm:$0xff]
      %v2325 = vld [vmem:[#allocation2 + $0x28] sm:$0xff]
      %v2326 = vld [vmem:[#allocation2 + $0x30] sm:$0xff]
      %v2327 = vld [vmem:[#allocation2 + $0x38] sm:$0xff]
      %v2328 = vld [vmem:[#allocation2 + $0x40] sm:$0xff]
      %v2329 = vld [vmem:[#allocation2 + $0x48] sm:$0xff]
      %v2330 = vld [vmem:[#allocation2 + $0x50] sm:$0xff]
      %v2331 = vld [vmem:[#allocation2 + $0x58] sm:$0xff]
      %v2332 = vld [vmem:[#allocation2 + $0x60] sm:$0xff]
      %v2333 = vld [vmem:[#allocation2 + $0x68] sm:$0xff]
      %v2334 = vld [vmem:[#allocation2 + $0x70] sm:$0xff]
      %v2335 = vld [vmem:[#allocation2 + $0x78] sm:$0xff]
      %v2336 = vld [vmem:[#allocation2 + $0x80] sm:$0xff]
      %v2337 = vld [vmem:[#allocation2 + $0x88] sm:$0xff]
      %v2338 = vld [vmem:[#allocation2 + $0x90] sm:$0xff]
      %v2339 = vld [vmem:[#allocation2 + $0x98] sm:$0xff]
      %v2340 = vld [vmem:[#allocation2 + $0xa0] sm:$0xff]
      %v2341 = vld [vmem:[#allocation2 + $0xa8] sm:$0xff]
      %v2342 = vld [vmem:[#allocation2 + $0xb0] sm:$0xff]
      %v2343 = vld [vmem:[#allocation2 + $0xb8] sm:$0xff]
      %v2344 = vld [vmem:[#allocation2 + $0xc0] sm:$0xff]
      %v2345 = vld [vmem:[#allocation2 + $0xc8] sm:$0xff]
      %v2346 = vld [vmem:[#allocation2 + $0xd0] sm:$0xff]
      %v2347 = vld [vmem:[#allocation2 + $0xd8] sm:$0xff]
      %v2348 = vld [vmem:[#allocation2 + $0xe0] sm:$0xff]
      %v2349 = vld [vmem:[#allocation2 + $0xe8] sm:$0xff]
      %v2350 = vld [vmem:[#allocation2 + $0xf0] sm:$0xff]
      %v2351 = vld [vmem:[#allocation2 + $0xf8] sm:$0xff]
      %v2352 = vadd.f32 %v2322, %v2229
      %v2353 = vadd.f32 %v2323, %v2232
      %v2354 = vadd.f32 %v2324, %v2235
      %v2355 = vadd.f32 %v2325, %v2238
      %v2356 = vadd.f32 %v2326, %v2241
      %v2357 = vadd.f32 %v2327, %v2244
      %v2358 = vadd.f32 %v2328, %v2247
      %v2359 = vadd.f32 %v2329, %v2250
      %v2360 = vadd.f32 %v2330, %v2253
      %v2361 = vadd.f32 %v2331, %v2256
      %v2362 = vadd.f32 %v2332, %v2259
      %v2363 = vadd.f32 %v2333, %v2262
      %v2364 = vadd.f32 %v2334, %v2265
      %v2365 = vadd.f32 %v2335, %v2268
      %v2366 = vadd.f32 %v2336, %v2271
      %v2367 = vadd.f32 %v2337, %v2274
      %v2368 = vadd.f32 %v2338, %v2277
      %v2369 = vadd.f32 %v2339, %v2280
      %v2370 = vadd.f32 %v2340, %v2283
      %v2371 = vadd.f32 %v2341, %v2286
      %v2372 = vadd.f32 %v2342, %v2289
      %v2373 = vadd.f32 %v2343, %v2292
      %v2374 = vadd.f32 %v2344, %v2295
      %v2375 = vadd.f32 %v2345, %v2298
      %v2376 = vadd.f32 %v2346, %v2301
      %v2377 = vadd.f32 %v2347, %v2304
      %v2378 = vadd.f32 %v2348, %v2307
      %v2379 = vadd.f32 %v2349, %v2310
      %v2380 = vadd.f32 %v2350, %v2313
      %v2381 = vadd.f32 %v2351, %v2316
      %2382 = vst.msk [vmem:[#allocation2 + $0x10] sm:$0xff] %vm1684, %v2352
      %2383 = vst.msk [vmem:[#allocation2 + $0x18] sm:$0xff] %vm1684, %v2353
      %2384 = vst.msk [vmem:[#allocation2 + $0x20] sm:$0xff] %vm1684, %v2354
      %2385 = vst.msk [vmem:[#allocation2 + $0x28] sm:$0xff] %vm1684, %v2355
      %2386 = vst.msk [vmem:[#allocation2 + $0x30] sm:$0xff] %vm1684, %v2356
      %2387 = vst.msk [vmem:[#allocation2 + $0x38] sm:$0xff] %vm1684, %v2357
      %2388 = vst.msk [vmem:[#allocation2 + $0x40] sm:$0xff] %vm1684, %v2358
      %2389 = vst.msk [vmem:[#allocation2 + $0x48] sm:$0xff] %vm1684, %v2359
      %2390 = vst.msk [vmem:[#allocation2 + $0x50] sm:$0xff] %vm1684, %v2360
      %2391 = vst.msk [vmem:[#allocation2 + $0x58] sm:$0xff] %vm1684, %v2361
      %2392 = vst.msk [vmem:[#allocation2 + $0x60] sm:$0xff] %vm1684, %v2362
      %2393 = vst.msk [vmem:[#allocation2 + $0x68] sm:$0xff] %vm1684, %v2363
      %2394 = vst.msk [vmem:[#allocation2 + $0x70] sm:$0xff] %vm1684, %v2364
      %2395 = vst.msk [vmem:[#allocation2 + $0x78] sm:$0xff] %vm1684, %v2365
      %2396 = vst.msk [vmem:[#allocation2 + $0x80] sm:$0xff] %vm1684, %v2366
      %2397 = vst.msk [vmem:[#allocation2 + $0x88] sm:$0xff] %vm1684, %v2367
      %2398 = vst.msk [vmem:[#allocation2 + $0x90] sm:$0xff] %vm1684, %v2368
      %2399 = vst.msk [vmem:[#allocation2 + $0x98] sm:$0xff] %vm1684, %v2369
      %2400 = vst.msk [vmem:[#allocation2 + $0xa0] sm:$0xff] %vm1684, %v2370
      %2401 = vst.msk [vmem:[#allocation2 + $0xa8] sm:$0xff] %vm1684, %v2371
      %2402 = vst.msk [vmem:[#allocation2 + $0xb0] sm:$0xff] %vm1684, %v2372
      %2403 = vst.msk [vmem:[#allocation2 + $0xb8] sm:$0xff] %vm1684, %v2373
      %2404 = vst.msk [vmem:[#allocation2 + $0xc0] sm:$0xff] %vm1684, %v2374
      %2405 = vst.msk [vmem:[#allocation2 + $0xc8] sm:$0xff] %vm1684, %v2375
      %2406 = vst.msk [vmem:[#allocation2 + $0xd0] sm:$0xff] %vm1684, %v2376
      %2407 = vst.msk [vmem:[#allocation2 + $0xd8] sm:$0xff] %vm1684, %v2377
      %2408 = vst.msk [vmem:[#allocation2 + $0xe0] sm:$0xff] %vm1684, %v2378
      %2409 = vst.msk [vmem:[#allocation2 + $0xe8] sm:$0xff] %vm1684, %v2379
      %2410 = vst.msk [vmem:[#allocation2 + $0xf0] sm:$0xff] %vm1684, %v2380
      %2411 = vst.msk [vmem:[#allocation2 + $0xf8] sm:$0xff] %vm1684, %v2381
      %v2412 = vld [vmem:[#allocation2] sm:$0xff]
      %v2413 = vld [vmem:[#allocation2 + $0x8] sm:$0xff]
      %v2414 = vld [vmem:[#allocation2 + $0x10] sm:$0xff]
      %v2415 = vld [vmem:[#allocation2 + $0x18] sm:$0xff]
      %v2416 = vld [vmem:[#allocation2 + $0x20] sm:$0xff]
      %v2417 = vld [vmem:[#allocation2 + $0x28] sm:$0xff]
      %v2418 = vld [vmem:[#allocation2 + $0x30] sm:$0xff]
      %v2419 = vld [vmem:[#allocation2 + $0x38] sm:$0xff]
      %v2420 = vld [vmem:[#allocation2 + $0x40] sm:$0xff]
      %v2421 = vld [vmem:[#allocation2 + $0x48] sm:$0xff]
      %v2422 = vld [vmem:[#allocation2 + $0x50] sm:$0xff]
      %v2423 = vld [vmem:[#allocation2 + $0x58] sm:$0xff]
      %v2424 = vld [vmem:[#allocation2 + $0x60] sm:$0xff]
      %v2425 = vld [vmem:[#allocation2 + $0x68] sm:$0xff]
      %v2426 = vld [vmem:[#allocation2 + $0x70] sm:$0xff]
      %v2427 = vld [vmem:[#allocation2 + $0x78] sm:$0xff]
      %v2428 = vld [vmem:[#allocation2 + $0x80] sm:$0xff]
      %v2429 = vld [vmem:[#allocation2 + $0x88] sm:$0xff]
      %v2430 = vld [vmem:[#allocation2 + $0x90] sm:$0xff]
      %v2431 = vld [vmem:[#allocation2 + $0x98] sm:$0xff]
      %v2432 = vld [vmem:[#allocation2 + $0xa0] sm:$0xff]
      %v2433 = vld [vmem:[#allocation2 + $0xa8] sm:$0xff]
      %v2434 = vld [vmem:[#allocation2 + $0xb0] sm:$0xff]
      %v2435 = vld [vmem:[#allocation2 + $0xb8] sm:$0xff]
      %v2436 = vld [vmem:[#allocation2 + $0xc0] sm:$0xff]
      %v2437 = vld [vmem:[#allocation2 + $0xc8] sm:$0xff]
      %v2438 = vld [vmem:[#allocation2 + $0xd0] sm:$0xff]
      %v2439 = vld [vmem:[#allocation2 + $0xd8] sm:$0xff]
      %v2440 = vld [vmem:[#allocation2 + $0xe0] sm:$0xff]
      %v2441 = vld [vmem:[#allocation2 + $0xe8] sm:$0xff]
      %v2442 = vld [vmem:[#allocation2 + $0xf0] sm:$0xff]
      %v2443 = vld [vmem:[#allocation2 + $0xf8] sm:$0xff]
      %v2444 = vld [vmem:[%s4] sm:$0x1]
      %v2446 = vperm.slane %v2444, 0
      %v2448 = vadd.f32 %v2412, %v2446
      %v2449 = vadd.f32 %v2413, %v2446
      %v2450 = vadd.f32 %v2414, %v2446
      %v2451 = vadd.f32 %v2415, %v2446
      %v2452 = vadd.f32 %v2416, %v2446
      %v2453 = vadd.f32 %v2417, %v2446
      %v2454 = vadd.f32 %v2418, %v2446
      %v2455 = vadd.f32 %v2419, %v2446
      %v2456 = vadd.f32 %v2420, %v2446
      %v2457 = vadd.f32 %v2421, %v2446
      %v2458 = vadd.f32 %v2422, %v2446
      %v2459 = vadd.f32 %v2423, %v2446
      %v2460 = vadd.f32 %v2424, %v2446
      %v2461 = vadd.f32 %v2425, %v2446
      %v2462 = vadd.f32 %v2426, %v2446
      %v2463 = vadd.f32 %v2427, %v2446
      %v2464 = vadd.f32 %v2428, %v2446
      %v2465 = vadd.f32 %v2429, %v2446
      %v2466 = vadd.f32 %v2430, %v2446
      %v2467 = vadd.f32 %v2431, %v2446
      %v2468 = vadd.f32 %v2432, %v2446
      %v2469 = vadd.f32 %v2433, %v2446
      %v2470 = vadd.f32 %v2434, %v2446
      %v2471 = vadd.f32 %v2435, %v2446
      %v2472 = vadd.f32 %v2436, %v2446
      %v2473 = vadd.f32 %v2437, %v2446
      %v2474 = vadd.f32 %v2438, %v2446
      %v2475 = vadd.f32 %v2439, %v2446
      %v2476 = vadd.f32 %v2440, %v2446
      %v2477 = vadd.f32 %v2441, %v2446
      %v2478 = vadd.f32 %v2442, %v2446
      %v2479 = vadd.f32 %v2443, %v2446
      %v2480 = vmax.f32 %v2448, 0.0
      %v2481 = vmax.f32 %v2449, 0.0
      %v2482 = vmax.f32 %v2450, 0.0
      %v2483 = vmax.f32 %v2451, 0.0
      %v2484 = vmax.f32 %v2452, 0.0
      %v2485 = vmax.f32 %v2453, 0.0
      %v2486 = vmax.f32 %v2454, 0.0
      %v2487 = vmax.f32 %v2455, 0.0
      %v2488 = vmax.f32 %v2456, 0.0
      %v2489 = vmax.f32 %v2457, 0.0
      %v2490 = vmax.f32 %v2458, 0.0
      %v2491 = vmax.f32 %v2459, 0.0
      %v2492 = vmax.f32 %v2460, 0.0
      %v2493 = vmax.f32 %v2461, 0.0
      %v2494 = vmax.f32 %v2462, 0.0
      %v2495 = vmax.f32 %v2463, 0.0
      %v2496 = vmax.f32 %v2464, 0.0
      %v2497 = vmax.f32 %v2465, 0.0
      %v2498 = vmax.f32 %v2466, 0.0
      %v2499 = vmax.f32 %v2467, 0.0
      %v2500 = vmax.f32 %v2468, 0.0
      %v2501 = vmax.f32 %v2469, 0.0
      %v2502 = vmax.f32 %v2470, 0.0
      %v2503 = vmax.f32 %v2471, 0.0
      %v2504 = vmax.f32 %v2472, 0.0
      %v2505 = vmax.f32 %v2473, 0.0
      %v2506 = vmax.f32 %v2474, 0.0
      %v2507 = vmax.f32 %v2475, 0.0
      %v2508 = vmax.f32 %v2476, 0.0
      %v2509 = vmax.f32 %v2477, 0.0
      %v2510 = vmax.f32 %v2478, 0.0
      %v2511 = vmax.f32 %v2479, 0.0
      %v2512 = vld [vmem:[%s5] sm:$0xf]
      %v2513 = vld [vmem:[%s6] sm:$0x1]
      %v2515 = vperm.slane %v2513, 0
      %v2518 = vsel %vm1684, %v2480, 0
      %v2521 = vsel %vm1684, %v2481, 0
      %v2524 = vsel %vm1684, %v2482, 0
      %v2527 = vsel %vm1684, %v2483, 0
      %v2530 = vsel %vm1684, %v2484, 0
      %v2533 = vsel %vm1684, %v2485, 0
      %v2536 = vsel %vm1684, %v2486, 0
      %v2539 = vsel %vm1684, %v2487, 0
      %v2542 = vsel %vm1684, %v2488, 0
      %v2545 = vsel %vm1684, %v2489, 0
      %v2548 = vsel %vm1684, %v2490, 0
      %v2551 = vsel %vm1684, %v2491, 0
      %v2554 = vsel %vm1684, %v2492, 0
      %v2557 = vsel %vm1684, %v2493, 0
      %v2560 = vsel %vm1684, %v2494, 0
      %v2563 = vsel %vm1684, %v2495, 0
      %v2566 = vsel %vm1684, %v2496, 0
      %v2569 = vsel %vm1684, %v2497, 0
      %v2572 = vsel %vm1684, %v2498, 0
      %v2575 = vsel %vm1684, %v2499, 0
      %v2578 = vsel %vm1684, %v2500, 0
      %v2581 = vsel %vm1684, %v2501, 0
      %v2584 = vsel %vm1684, %v2502, 0
      %v2587 = vsel %vm1684, %v2503, 0
      %v2590 = vsel %vm1684, %v2504, 0
      %v2593 = vsel %vm1684, %v2505, 0
      %v2596 = vsel %vm1684, %v2506, 0
      %v2599 = vsel %vm1684, %v2507, 0
      %v2602 = vsel %vm1684, %v2508, 0
      %v2605 = vsel %vm1684, %v2509, 0
      %v2608 = vsel %vm1684, %v2510, 0
      %v2611 = vsel %vm1684, %v2511, 0
      %v2614 = vsel %vm1850, %v2512, 0
      %2616 = vmatpush.msra.mxu0 0.0
      %2617 = vmatpush.msra.mxu0 0.0
      %2618 = vmatpush.msra.mxu0 0.0
      %2619 = vmatpush.msra.mxu0 0.0
      %2620 = vmatpush.msra.mxu0 0.0
      %2621 = vmatpush.msra.mxu0 0.0
      %2622 = vmatpush.msra.mxu0 0.0
      %2623 = vmatpush.msra.mxu0 0.0
      %2624 = vmatpush.msra.mxu0 0.0
      %2625 = vmatpush.msra.mxu0 0.0
      %2626 = vmatpush.msra.mxu0 0.0
      %2627 = vmatpush.msra.mxu0 0.0
      %2628 = vmatpush.msra.mxu0 0.0
      %2629 = vmatpush.msra.mxu0 0.0
      %2630 = vmatpush.msra.mxu0 0.0
      %2631 = vmatpush.msra.mxu0 %v2614
      %2632 = vmatmul.f32.gmra.mxu0 %v2518
      %v2633 = vpop.f32.mrf.mxu0
      %v2634 = vadd.f32 %v2515, %v2633
      %2635 = vmatmul.f32.gmra.mxu0 %v2521
      %v2636 = vpop.f32.mrf.mxu0
      %v2637 = vadd.f32 %v2515, %v2636
      %2638 = vmatmul.f32.gmra.mxu0 %v2524
      %v2639 = vpop.f32.mrf.mxu0
      %v2640 = vadd.f32 %v2515, %v2639
      %2641 = vmatmul.f32.gmra.mxu0 %v2527
      %v2642 = vpop.f32.mrf.mxu0
      %v2643 = vadd.f32 %v2515, %v2642
      %2644 = vmatmul.f32.gmra.mxu0 %v2530
      %v2645 = vpop.f32.mrf.mxu0
      %v2646 = vadd.f32 %v2515, %v2645
      %2647 = vmatmul.f32.gmra.mxu0 %v2533
      %v2648 = vpop.f32.mrf.mxu0
      %v2649 = vadd.f32 %v2515, %v2648
      %2650 = vmatmul.f32.gmra.mxu0 %v2536
      %v2651 = vpop.f32.mrf.mxu0
      %v2652 = vadd.f32 %v2515, %v2651
      %2653 = vmatmul.f32.gmra.mxu0 %v2539
      %v2654 = vpop.f32.mrf.mxu0
      %v2655 = vadd.f32 %v2515, %v2654
      %2656 = vmatmul.f32.gmra.mxu0 %v2542
      %v2657 = vpop.f32.mrf.mxu0
      %v2658 = vadd.f32 %v2515, %v2657
      %2659 = vmatmul.f32.gmra.mxu0 %v2545
      %v2660 = vpop.f32.mrf.mxu0
      %v2661 = vadd.f32 %v2515, %v2660
      %2662 = vmatmul.f32.gmra.mxu0 %v2548
      %v2663 = vpop.f32.mrf.mxu0
      %v2664 = vadd.f32 %v2515, %v2663
      %2665 = vmatmul.f32.gmra.mxu0 %v2551
      %v2666 = vpop.f32.mrf.mxu0
      %v2667 = vadd.f32 %v2515, %v2666
      %2668 = vmatmul.f32.gmra.mxu0 %v2554
      %v2669 = vpop.f32.mrf.mxu0
      %v2670 = vadd.f32 %v2515, %v2669
      %2671 = vmatmul.f32.gmra.mxu0 %v2557
      %v2672 = vpop.f32.mrf.mxu0
      %v2673 = vadd.f32 %v2515, %v2672
      %2674 = vmatmul.f32.gmra.mxu0 %v2560
      %v2675 = vpop.f32.mrf.mxu0
      %v2676 = vadd.f32 %v2515, %v2675
      %2677 = vmatmul.f32.gmra.mxu0 %v2563
      %v2678 = vpop.f32.mrf.mxu0
      %v2679 = vadd.f32 %v2515, %v2678
      %2680 = vmatmul.f32.gmra.mxu0 %v2566
      %v2681 = vpop.f32.mrf.mxu0
      %v2682 = vadd.f32 %v2515, %v2681
      %2683 = vmatmul.f32.gmra.mxu0 %v2569
      %v2684 = vpop.f32.mrf.mxu0
      %v2685 = vadd.f32 %v2515, %v2684
      %2686 = vmatmul.f32.gmra.mxu0 %v2572
      %v2687 = vpop.f32.mrf.mxu0
      %v2688 = vadd.f32 %v2515, %v2687
      %2689 = vmatmul.f32.gmra.mxu0 %v2575
      %v2690 = vpop.f32.mrf.mxu0
      %v2691 = vadd.f32 %v2515, %v2690
      %2692 = vmatmul.f32.gmra.mxu0 %v2578
      %v2693 = vpop.f32.mrf.mxu0
      %v2694 = vadd.f32 %v2515, %v2693
      %2695 = vmatmul.f32.gmra.mxu0 %v2581
      %v2696 = vpop.f32.mrf.mxu0
      %v2697 = vadd.f32 %v2515, %v2696
      %2698 = vmatmul.f32.gmra.mxu0 %v2584
      %v2699 = vpop.f32.mrf.mxu0
      %v2700 = vadd.f32 %v2515, %v2699
      %2701 = vmatmul.f32.gmra.mxu0 %v2587
      %v2702 = vpop.f32.mrf.mxu0
      %v2703 = vadd.f32 %v2515, %v2702
      %2704 = vmatmul.f32.gmra.mxu0 %v2590
      %v2705 = vpop.f32.mrf.mxu0
      %v2706 = vadd.f32 %v2515, %v2705
      %2707 = vmatmul.f32.gmra.mxu0 %v2593
      %v2708 = vpop.f32.mrf.mxu0
      %v2709 = vadd.f32 %v2515, %v2708
      %2710 = vmatmul.f32.gmra.mxu0 %v2596
      %v2711 = vpop.f32.mrf.mxu0
      %v2712 = vadd.f32 %v2515, %v2711
      %2713 = vmatmul.f32.gmra.mxu0 %v2599
      %v2714 = vpop.f32.mrf.mxu0
      %v2715 = vadd.f32 %v2515, %v2714
      %2716 = vmatmul.f32.gmra.mxu0 %v2602
      %v2717 = vpop.f32.mrf.mxu0
      %v2718 = vadd.f32 %v2515, %v2717
      %2719 = vmatmul.f32.gmra.mxu0 %v2605
      %v2720 = vpop.f32.mrf.mxu0
      %v2721 = vadd.f32 %v2515, %v2720
      %2722 = vmatmul.f32.gmra.mxu0 %v2608
      %v2723 = vpop.f32.mrf.mxu0
      %v2724 = vadd.f32 %v2515, %v2723
      %2725 = vmatmul.f32.gmra.mxu0 %v2611
      %v2726 = vpop.f32.mrf.mxu0
      %v2727 = vadd.f32 %v2515, %v2726
      %2728 = vdwg.mxu0
      %v2729 = vadd.f32 %v2634, %v279
      %v2730 = vadd.f32 %v2637, %v280
      %v2731 = vadd.f32 %v2640, %v281
      %v2732 = vadd.f32 %v2643, %v282
      %v2733 = vadd.f32 %v2646, %v283
      %v2734 = vadd.f32 %v2649, %v284
      %v2735 = vadd.f32 %v2652, %v285
      %v2736 = vadd.f32 %v2655, %v286
      %v2737 = vadd.f32 %v2658, %v287
      %v2738 = vadd.f32 %v2661, %v288
      %v2739 = vadd.f32 %v2664, %v289
      %v2740 = vadd.f32 %v2667, %v290
      %v2741 = vadd.f32 %v2670, %v291
      %v2742 = vadd.f32 %v2673, %v292
      %v2743 = vadd.f32 %v2676, %v293
      %v2744 = vadd.f32 %v2679, %v294
      %v2745 = vadd.f32 %v2682, %v295
      %v2746 = vadd.f32 %v2685, %v296
      %v2747 = vadd.f32 %v2688, %v297
      %v2748 = vadd.f32 %v2691, %v298
      %v2749 = vadd.f32 %v2694, %v299
      %v2750 = vadd.f32 %v2697, %v300
      %v2751 = vadd.f32 %v2700, %v301
      %v2752 = vadd.f32 %v2703, %v302
      %v2753 = vadd.f32 %v2706, %v303
      %v2754 = vadd.f32 %v2709, %v304
      %v2755 = vadd.f32 %v2712, %v305
      %v2756 = vadd.f32 %v2715, %v306
      %v2757 = vadd.f32 %v2718, %v307
      %v2758 = vadd.f32 %v2721, %v308
      %v2759 = vadd.f32 %v2724, %v309
      %v2760 = vadd.f32 %v2727, %v310
      %v2761 = vmax.f32 %v2729, 0.0
      %v2762 = vmax.f32 %v2730, 0.0
      %v2763 = vmax.f32 %v2731, 0.0
      %v2764 = vmax.f32 %v2732, 0.0
      %v2765 = vmax.f32 %v2733, 0.0
      %v2766 = vmax.f32 %v2734, 0.0
      %v2767 = vmax.f32 %v2735, 0.0
      %v2768 = vmax.f32 %v2736, 0.0
      %v2769 = vmax.f32 %v2737, 0.0
      %v2770 = vmax.f32 %v2738, 0.0
      %v2771 = vmax.f32 %v2739, 0.0
      %v2772 = vmax.f32 %v2740, 0.0
      %v2773 = vmax.f32 %v2741, 0.0
      %v2774 = vmax.f32 %v2742, 0.0
      %v2775 = vmax.f32 %v2743, 0.0
      %v2776 = vmax.f32 %v2744, 0.0
      %v2777 = vmax.f32 %v2745, 0.0
      %v2778 = vmax.f32 %v2746, 0.0
      %v2779 = vmax.f32 %v2747, 0.0
      %v2780 = vmax.f32 %v2748, 0.0
      %v2781 = vmax.f32 %v2749, 0.0
      %v2782 = vmax.f32 %v2750, 0.0
      %v2783 = vmax.f32 %v2751, 0.0
      %v2784 = vmax.f32 %v2752, 0.0
      %v2785 = vmax.f32 %v2753, 0.0
      %v2786 = vmax.f32 %v2754, 0.0
      %v2787 = vmax.f32 %v2755, 0.0
      %v2788 = vmax.f32 %v2756, 0.0
      %v2789 = vmax.f32 %v2757, 0.0
      %v2790 = vmax.f32 %v2758, 0.0
      %v2791 = vmax.f32 %v2759, 0.0
      %v2792 = vmax.f32 %v2760, 0.0
      %2793 = vst.msk [vmem:[%s278] sm:$0xff] %vm317, %v2761
      %2794 = vst.msk [vmem:[%s278 + $0x8] sm:$0xff] %vm317, %v2762
      %2795 = vst.msk [vmem:[%s278 + $0x10] sm:$0xff] %vm317, %v2763
      %2796 = vst.msk [vmem:[%s278 + $0x18] sm:$0xff] %vm317, %v2764
      %2797 = vst.msk [vmem:[%s278 + $0x20] sm:$0xff] %vm317, %v2765
      %2798 = vst.msk [vmem:[%s278 + $0x28] sm:$0xff] %vm317, %v2766
      %2799 = vst.msk [vmem:[%s278 + $0x30] sm:$0xff] %vm317, %v2767
      %2800 = vst.msk [vmem:[%s278 + $0x38] sm:$0xff] %vm317, %v2768
      %2801 = vst.msk [vmem:[%s278 + $0x40] sm:$0xff] %vm317, %v2769
      %2802 = vst.msk [vmem:[%s278 + $0x48] sm:$0xff] %vm317, %v2770
      %2803 = vst.msk [vmem:[%s278 + $0x50] sm:$0xff] %vm317, %v2771
      %2804 = vst.msk [vmem:[%s278 + $0x58] sm:$0xff] %vm317, %v2772
      %2805 = vst.msk [vmem:[%s278 + $0x60] sm:$0xff] %vm317, %v2773
      %2806 = vst.msk [vmem:[%s278 + $0x68] sm:$0xff] %vm317, %v2774
      %2807 = vst.msk [vmem:[%s278 + $0x70] sm:$0xff] %vm317, %v2775
      %2808 = vst.msk [vmem:[%s278 + $0x78] sm:$0xff] %vm317, %v2776
      %2809 = vst.msk [vmem:[%s278 + $0x80] sm:$0xff] %vm317, %v2777
      %2810 = vst.msk [vmem:[%s278 + $0x88] sm:$0xff] %vm317, %v2778
      %2811 = vst.msk [vmem:[%s278 + $0x90] sm:$0xff] %vm317, %v2779
      %2812 = vst.msk [vmem:[%s278 + $0x98] sm:$0xff] %vm317, %v2780
      %2813 = vst.msk [vmem:[%s278 + $0xa0] sm:$0xff] %vm317, %v2781
      %2814 = vst.msk [vmem:[%s278 + $0xa8] sm:$0xff] %vm317, %v2782
      %2815 = vst.msk [vmem:[%s278 + $0xb0] sm:$0xff] %vm317, %v2783
      %2816 = vst.msk [vmem:[%s278 + $0xb8] sm:$0xff] %vm317, %v2784
      %2817 = vst.msk [vmem:[%s278 + $0xc0] sm:$0xff] %vm317, %v2785
      %2818 = vst.msk [vmem:[%s278 + $0xc8] sm:$0xff] %vm317, %v2786
      %2819 = vst.msk [vmem:[%s278 + $0xd0] sm:$0xff] %vm317, %v2787
      %2820 = vst.msk [vmem:[%s278 + $0xd8] sm:$0xff] %vm317, %v2788
      %2821 = vst.msk [vmem:[%s278 + $0xe0] sm:$0xff] %vm317, %v2789
      %2822 = vst.msk [vmem:[%s278 + $0xe8] sm:$0xff] %vm317, %v2790
      %2823 = vst.msk [vmem:[%s278 + $0xf0] sm:$0xff] %vm317, %v2791
      %2824 = vst.msk [vmem:[%s278 + $0xf8] sm:$0xff] %vm317, %v2792
      %p2825 = scmp.lt.s32.totalorder %s18, 1
      %s2826 = scalar_select %p2825, %s18, 1
      %s2827 = smul.addr %s2826, 32
      %s2828 = smul.addr %s2827, 8
      %s2829 = scalar_lea.vmem %s7, %s2828
      // Predicated region
      $region49: #{bottleneck_forward.1} parent=47 // pred_check
        %p2830 = pneg %p188
      $region50: #{bottleneck_forward.1} parent=47 // pred_check_branch
        %2832 = sbr.rel (%p2830) target = $region52
      $region51: #{bottleneck_forward.1} parent=47 // pred_region
        _
      $region52: #{bottleneck_forward.1} parent=47 // pred_fallthru
        _
    $region48: #{bottleneck_forward.1} parent=5 // pred_fallthru
      _
    %p2833 = scmp.le.s32.totalorder 2, %s13
    // Predicated region
    $region53: #{bottleneck_forward.1} parent=5 // pred_check
      %p2834 = pneg %p2833
    $region54: #{bottleneck_forward.1} parent=5 // pred_check_branch
      %2836 = sbr.rel (%p2834) target = $region56
    $region55: #{bottleneck_forward.1} parent=5 // pred_region
      %s2837 = ssub.s32 %s13, 2
      // Predicated region
      $region57: #{bottleneck_forward.1} parent=55 // pred_check
        %p2838 = pneg %p194
      $region58: #{bottleneck_forward.1} parent=55 // pred_check_branch
        %2840 = sbr.rel (%p2838) target = $region60
      $region59: #{bottleneck_forward.1} parent=55 // pred_region
        %p2841 = scmp.lt.s32.totalorder %s19, 1
        %s2842 = scalar_select %p2841, %s19, 1
        %s2843 = smul.addr %s2842, 32
        %s2844 = smul.addr %s2843, 8
        %s2845 = scalar_lea.vmem %s7, %s2844
      $region60: #{bottleneck_forward.1} parent=55 // pred_fallthru
        _
    $region56: #{bottleneck_forward.1} parent=5 // pred_fallthru
      _
  $region6: #{bottleneck_forward.1} parent=0 // loop_footer
    %s17 = sadd.s32 1, %s13
  $region7: #{bottleneck_forward.1} parent=0 // loop_footer_branch
    %12 = sbr.rel target = $region3
  $region8: #{bottleneck_forward.1} parent=0 // loop_exit
    _

</llo_original>
